<compile_context>
chip_gen: v7x
topology: tpu7x:2x2x1
jax: 0.10.0
libtpu: 0.0.40
codegen_flags: <defaults>
</compile_context>

<pallas_src>
import functools

import jax
import jax.numpy as jnp
from jax.experimental import pallas as pl
from jax.experimental.pallas import tpu as pltpu

DIMS = [784, 512, 256, 128, 64, 32, 10]        # true layer widths
PADDED = [784, 512, 256, 128, 128, 128, 128]   # lane-dense widths used in-kernel
NEG_BIG = -1e30                                # pad-lane bias for the final logits


def _round_up(x, m):
    return ((x + m - 1) // m) * m


def _cdiv(a, b):
    return (a + b - 1) // b


def _mlp_kernel(x_ref,
                w1_ref, b1_ref, w2_ref, b2_ref, w3_ref, b3_ref,
                w4_ref, b4_ref, w5_ref, b5_ref, w6_ref, b6_ref,
                out_ref):
    """Whole 6-layer MLP forward for one batch tile, entirely in VMEM.

    bf16 MXU matmuls with f32 accumulation; bias / ReLU / log_softmax in f32.
    """
    h = x_ref[...]                                  # bf16, streamed in bf16

    def linear_relu(h_bf16, w_ref, b_ref):
        z = jnp.dot(h_bf16, w_ref[...],
                    preferred_element_type=jnp.float32) + b_ref[...]
        return jnp.maximum(z, 0.0).astype(jnp.bfloat16)

    h = linear_relu(h, w1_ref, b1_ref)
    h = linear_relu(h, w2_ref, b2_ref)
    h = linear_relu(h, w3_ref, b3_ref)
    h = linear_relu(h, w4_ref, b4_ref)
    h = linear_relu(h, w5_ref, b5_ref)

    # Final linear (no ReLU).  Output width is padded to 128 lanes; padded
    # lanes carry a -1e30 bias so exp() underflows to exactly 0 in f32.
    logits = jnp.dot(h, w6_ref[...],
                     preferred_element_type=jnp.float32) + b6_ref[...]

    # log_softmax along dim=1 (numerically stable).
    m = jnp.max(logits, axis=-1, keepdims=True)
    shifted = logits - m
    lse = jnp.log(jnp.sum(jnp.exp(shifted), axis=-1, keepdims=True))
    out_ref[...] = (shifted - lse).astype(out_ref.dtype)


def _choose_tiling(B, batch_tile):
    """Pick (tile, n_steps):
       * tiny/small batches (<=256 rows) -> a single fused step,
       * moderate batches -> exactly 2 steps (both v7x TensorCores do work),
       * large batches -> ~batch_tile rows/step, tile shrunk for ragged sizes
         so we never pad up a nearly-full extra tile."""
    B16 = _round_up(max(B, 1), 16)   # bf16 packs 16 rows per sublane group
    if B16 <= 256:
        n_steps = 1
    elif B16 <= 2 * batch_tile:
        n_steps = 2
    else:
        n_steps = _cdiv(B16, batch_tile)
    tile = _round_up(_cdiv(B16, n_steps), 16)
    return tile, n_steps


@functools.partial(jax.jit, static_argnames=("batch_tile",))
def mlp_forward(x, params, batch_tile=512):
    """x: (..., 1, 28, 28) or (B, 784).  params: list of 6 (W[in,out], b[out])."""
    x = x.reshape(-1, DIMS[0]).astype(jnp.bfloat16)   # stream the input in bf16
    B = x.shape[0]

    tile, n_steps = _choose_tiling(B, batch_tile)
    B_pad = tile * n_steps
    if B_pad != B:
        x = jnp.pad(x, ((0, B_pad - B), (0, 0)))

    n_layers = len(params)
    flat_params = []
    param_specs = []
    param_bytes = 0
    for li, (w, b) in enumerate(params):
        w = w.astype(jnp.bfloat16)
        b = b.reshape(1, -1).astype(jnp.float32)
        in_p, out_p = PADDED[li], PADDED[li + 1]
        pad_in = in_p - w.shape[0]
        pad_out = out_p - w.shape[1]
        if pad_in or pad_out:
            w = jnp.pad(w, ((0, pad_in), (0, pad_out)))
        if pad_out:
            fill = NEG_BIG if li == n_layers - 1 else 0.0
            b = jnp.pad(b, ((0, 0), (0, pad_out)), constant_values=fill)
        flat_params.extend([w, b])
        # Constant index_map -> params stay VMEM-resident across grid steps.
        # TODO(synk): pipeline_mode=pl.Buffered(1) would drop the redundant
        # second param buffer (~1.2 MB); left at the default for compile safety.
        param_specs.append(pl.BlockSpec(w.shape, lambda i: (0, 0)))
        param_specs.append(pl.BlockSpec(b.shape, lambda i: (0, 0)))
        param_bytes += int(w.size) * 2 + int(b.size) * 4

    x_spec = pl.BlockSpec((tile, DIMS[0]), lambda i: (i, 0))
    out_spec = pl.BlockSpec((tile, PADDED[-1]), lambda i: (i, 0))

    # VMEM budget: double-buffered x/out tiles + resident params +
    # intermediate activations (bf16 act + f32 pre-activation) + headroom.
    x_tile_bytes = tile * DIMS[0] * 2
    out_tile_bytes = tile * PADDED[-1] * 4
    act_bytes = tile * sum(PADDED[1:]) * 6
    vmem_bytes = (2 * (x_tile_bytes + out_tile_bytes + param_bytes)
                  + act_bytes + 8 * 1024 * 1024)
    vmem_bytes = min(56 * 1024 * 1024, max(32 * 1024 * 1024, vmem_bytes))

    flops = 2 * B_pad * sum(PADDED[i] * PADDED[i + 1] for i in range(n_layers))
    cost = pl.CostEstimate(
        flops=flops,
        transcendentals=B_pad * (PADDED[-1] + 1),
        bytes_accessed=(B_pad * DIMS[0] * 2 + param_bytes
                        + B_pad * PADDED[-1] * 4),
    )

    out_padded = pl.pallas_call(
        _mlp_kernel,
        out_shape=jax.ShapeDtypeStruct((B_pad, PADDED[-1]), jnp.float32),
        grid_spec=pltpu.PrefetchScalarGridSpec(
            num_scalar_prefetch=0,
            grid=(n_steps,),
            in_specs=[x_spec] + param_specs,
            out_specs=out_spec,
        ),
        compiler_params=pltpu.CompilerParams(
            dimension_semantics=("parallel",),
            vmem_limit_bytes=vmem_bytes),
        cost_estimate=cost,
    )(x, *flat_params)

    return out_padded[:B, :DIMS[-1]]


def init_params(key):
    """Deterministic init mimicking PyTorch Linear default U(-1/sqrt(fan_in), +)."""
    params = []
    for i in range(len(DIMS) - 1):
        fan_in, fan_out = DIMS[i], DIMS[i + 1]
        key, kw, kb = jax.random.split(key, 3)
        bound = 1.0 / jnp.sqrt(jnp.float32(fan_in))
        w = jax.random.uniform(kw, (fan_in, fan_out), jnp.float32, -bound, bound)
        b = jax.random.uniform(kb, (1, fan_out), jnp.float32, -bound, bound)
        params.append((w, b))
    return params


def reference_forward(x, params):
    """Pure-JAX reference emulating the same bf16-operand / f32-accum math."""
    h = x.reshape(-1, DIMS[0]).astype(jnp.float32)
    n = len(params)
    for i, (w, b) in enumerate(params):
        z = jnp.dot(h.astype(jnp.bfloat16), w.astype(jnp.bfloat16),
                    preferred_element_type=jnp.float32) + b.reshape(1, -1)
        h = jnp.maximum(z, 0.0) if i < n - 1 else z
    return jax.nn.log_softmax(h, axis=1)


if __name__ == "__main__":
    root = jax.random.PRNGKey(0)
    kparam, kx1, kx2, kx3 = jax.random.split(root, 4)
    params = init_params(kparam)

    # Small MNIST-like batch: (B, 1, 28, 28); forward does x.view(-1, 784).
    B1 = 8
    x1 = jax.random.normal(kx1, (B1, 1, 28, 28), jnp.float32)
    out1 = jax.block_until_ready(mlp_forward(x1, params))
    ref1 = reference_forward(x1, params)
    assert out1.shape == (B1, 10), out1.shape
    assert jnp.allclose(out1, ref1, atol=2e-3, rtol=2e-3), \
        f"max abs err = {jnp.max(jnp.abs(out1 - ref1))}"

    # Ragged tiny batch (padded to a single 16-row tile inside the wrapper).
    B2 = 12
    x2 = jax.random.normal(kx2, (B2, 1, 28, 28), jnp.float32)
    out2 = jax.block_until_ready(mlp_forward(x2, params))
    ref2 = reference_forward(x2, params)
    assert out2.shape == (B2, 10), out2.shape
    assert jnp.allclose(out2, ref2, atol=2e-3, rtol=2e-3), \
        f"max abs err = {jnp.max(jnp.abs(out2 - ref2))}"

    # Moderate batch: exercises the >=2-grid-step path (keeps both v7x cores busy).
    B3 = 272
    x3 = jax.random.normal(kx3, (B3, 1, 28, 28), jnp.float32)
    out3 = jax.block_until_ready(mlp_forward(x3, params))
    ref3 = reference_forward(x3, params)
    assert out3.shape == (B3, 10), out3.shape
    assert jnp.allclose(out3, ref3, atol=2e-3, rtol=2e-3), \
        f"max abs err = {jnp.max(jnp.abs(out3 - ref3))}"

    print("KERNEL_OK")
</pallas_src>

<mosaic_0001>
module attributes {stable_mosaic.version = 11 : i64} {
  func.func @_mlp_kernel(%arg0: i32, %arg1: memref<16x784xbf16, #tpu.memory_space<vmem>>, %arg2: memref<784x512xbf16, #tpu.memory_space<vmem>>, %arg3: memref<1x512xf32, #tpu.memory_space<vmem>>, %arg4: memref<512x256xbf16, #tpu.memory_space<vmem>>, %arg5: memref<1x256xf32, #tpu.memory_space<vmem>>, %arg6: memref<256x128xbf16, #tpu.memory_space<vmem>>, %arg7: memref<1x128xf32, #tpu.memory_space<vmem>>, %arg8: memref<128x128xbf16, #tpu.memory_space<vmem>>, %arg9: memref<1x128xf32, #tpu.memory_space<vmem>>, %arg10: memref<128x128xbf16, #tpu.memory_space<vmem>>, %arg11: memref<1x128xf32, #tpu.memory_space<vmem>>, %arg12: memref<128x128xbf16, #tpu.memory_space<vmem>>, %arg13: memref<1x128xf32, #tpu.memory_space<vmem>>, %arg14: memref<16x128xf32, #tpu.memory_space<vmem>>) attributes {dimension_semantics = [#tpu.dimension_semantics<parallel>], iteration_bounds = array<i64: 1>, scalar_prefetch = 0 : i64, scratch_operands = 0 : i64, tpu.core_type = #tpu.core_type<tc>, window_params = [{transform_indices = @transform_0, window_bounds = array<i64: 16, 784>}, {pipeline_mode = #tpu.pipeline_mode<synchronous>, transform_indices = @transform_1, window_bounds = array<i64: 784, 512>}, {pipeline_mode = #tpu.pipeline_mode<synchronous>, transform_indices = @transform_2, window_bounds = array<i64: 1, 512>}, {pipeline_mode = #tpu.pipeline_mode<synchronous>, transform_indices = @transform_3, window_bounds = array<i64: 512, 256>}, {pipeline_mode = #tpu.pipeline_mode<synchronous>, transform_indices = @transform_4, window_bounds = array<i64: 1, 256>}, {pipeline_mode = #tpu.pipeline_mode<synchronous>, transform_indices = @transform_5, window_bounds = array<i64: 256, 128>}, {pipeline_mode = #tpu.pipeline_mode<synchronous>, transform_indices = @transform_6, window_bounds = array<i64: 1, 128>}, {pipeline_mode = #tpu.pipeline_mode<synchronous>, transform_indices = @transform_7, window_bounds = array<i64: 128, 128>}, {pipeline_mode = #tpu.pipeline_mode<synchronous>, transform_indices = @transform_8, window_bounds = array<i64: 1, 128>}, {pipeline_mode = #tpu.pipeline_mode<synchronous>, transform_indices = @transform_9, window_bounds = array<i64: 128, 128>}, {pipeline_mode = #tpu.pipeline_mode<synchronous>, transform_indices = @transform_10, window_bounds = array<i64: 1, 128>}, {pipeline_mode = #tpu.pipeline_mode<synchronous>, transform_indices = @transform_11, window_bounds = array<i64: 128, 128>}, {pipeline_mode = #tpu.pipeline_mode<synchronous>, transform_indices = @transform_12, window_bounds = array<i64: 1, 128>}, {transform_indices = @transform_13, window_bounds = array<i64: 16, 128>}]} {
    %c0 = arith.constant 0 : index
    %c0_0 = arith.constant 0 : index
    %0 = vector.load %arg1[%c0, %c0_0] : memref<16x784xbf16, #tpu.memory_space<vmem>>, vector<16x784xbf16>
    %c0_1 = arith.constant 0 : index
    %c0_2 = arith.constant 0 : index
    %1 = vector.load %arg2[%c0_1, %c0_2] : memref<784x512xbf16, #tpu.memory_space<vmem>>, vector<784x512xbf16>
    %cst = arith.constant dense<0.000000e+00> : vector<16x512xf32>
    %2 = tpu.matmul %0, %1, %cst {dimension_numbers = #tpu.dot_dimension_numbers<[1], [0], [0], [1], [0, 0, 1, 1], [], []>} : vector<16x784xbf16>, vector<784x512xbf16>, vector<16x512xf32> -> vector<16x512xf32>
    %c0_3 = arith.constant 0 : index
    %c0_4 = arith.constant 0 : index
    %3 = vector.load %arg3[%c0_3, %c0_4] : memref<1x512xf32, #tpu.memory_space<vmem>>, vector<1x512xf32>
    %4 = vector.broadcast %3 : vector<1x512xf32> to vector<16x512xf32>
    %5 = arith.addf %2, %4 : vector<16x512xf32>
    %cst_5 = arith.constant 0.000000e+00 : f32
    %6 = vector.broadcast %cst_5 : f32 to vector<16x512xf32>
    %7 = arith.maximumf %5, %6 : vector<16x512xf32>
    %8 = arith.truncf %7 : vector<16x512xf32> to vector<16x512xbf16>
    %c0_6 = arith.constant 0 : index
    %c0_7 = arith.constant 0 : index
    %9 = vector.load %arg4[%c0_6, %c0_7] : memref<512x256xbf16, #tpu.memory_space<vmem>>, vector<512x256xbf16>
    %cst_8 = arith.constant dense<0.000000e+00> : vector<16x256xf32>
    %10 = tpu.matmul %8, %9, %cst_8 {dimension_numbers = #tpu.dot_dimension_numbers<[1], [0], [0], [1], [0, 0, 1, 1], [], []>} : vector<16x512xbf16>, vector<512x256xbf16>, vector<16x256xf32> -> vector<16x256xf32>
    %c0_9 = arith.constant 0 : index
    %c0_10 = arith.constant 0 : index
    %11 = vector.load %arg5[%c0_9, %c0_10] : memref<1x256xf32, #tpu.memory_space<vmem>>, vector<1x256xf32>
    %12 = vector.broadcast %11 : vector<1x256xf32> to vector<16x256xf32>
    %13 = arith.addf %10, %12 : vector<16x256xf32>
    %cst_11 = arith.constant 0.000000e+00 : f32
    %14 = vector.broadcast %cst_11 : f32 to vector<16x256xf32>
    %15 = arith.maximumf %13, %14 : vector<16x256xf32>
    %16 = arith.truncf %15 : vector<16x256xf32> to vector<16x256xbf16>
    %c0_12 = arith.constant 0 : index
    %c0_13 = arith.constant 0 : index
    %17 = vector.load %arg6[%c0_12, %c0_13] : memref<256x128xbf16, #tpu.memory_space<vmem>>, vector<256x128xbf16>
    %cst_14 = arith.constant dense<0.000000e+00> : vector<16x128xf32>
    %18 = tpu.matmul %16, %17, %cst_14 {dimension_numbers = #tpu.dot_dimension_numbers<[1], [0], [0], [1], [0, 0, 1, 1], [], []>} : vector<16x256xbf16>, vector<256x128xbf16>, vector<16x128xf32> -> vector<16x128xf32>
    %c0_15 = arith.constant 0 : index
    %c0_16 = arith.constant 0 : index
    %19 = vector.load %arg7[%c0_15, %c0_16] : memref<1x128xf32, #tpu.memory_space<vmem>>, vector<1x128xf32>
    %20 = vector.broadcast %19 : vector<1x128xf32> to vector<16x128xf32>
    %21 = arith.addf %18, %20 : vector<16x128xf32>
    %cst_17 = arith.constant 0.000000e+00 : f32
    %22 = vector.broadcast %cst_17 : f32 to vector<16x128xf32>
    %23 = arith.maximumf %21, %22 : vector<16x128xf32>
    %24 = arith.truncf %23 : vector<16x128xf32> to vector<16x128xbf16>
    %c0_18 = arith.constant 0 : index
    %c0_19 = arith.constant 0 : index
    %25 = vector.load %arg8[%c0_18, %c0_19] : memref<128x128xbf16, #tpu.memory_space<vmem>>, vector<128x128xbf16>
    %cst_20 = arith.constant dense<0.000000e+00> : vector<16x128xf32>
    %26 = tpu.matmul %24, %25, %cst_20 {dimension_numbers = #tpu.dot_dimension_numbers<[1], [0], [0], [1], [0, 0, 1, 1], [], []>} : vector<16x128xbf16>, vector<128x128xbf16>, vector<16x128xf32> -> vector<16x128xf32>
    %c0_21 = arith.constant 0 : index
    %c0_22 = arith.constant 0 : index
    %27 = vector.load %arg9[%c0_21, %c0_22] : memref<1x128xf32, #tpu.memory_space<vmem>>, vector<1x128xf32>
    %28 = vector.broadcast %27 : vector<1x128xf32> to vector<16x128xf32>
    %29 = arith.addf %26, %28 : vector<16x128xf32>
    %cst_23 = arith.constant 0.000000e+00 : f32
    %30 = vector.broadcast %cst_23 : f32 to vector<16x128xf32>
    %31 = arith.maximumf %29, %30 : vector<16x128xf32>
    %32 = arith.truncf %31 : vector<16x128xf32> to vector<16x128xbf16>
    %c0_24 = arith.constant 0 : index
    %c0_25 = arith.constant 0 : index
    %33 = vector.load %arg10[%c0_24, %c0_25] : memref<128x128xbf16, #tpu.memory_space<vmem>>, vector<128x128xbf16>
    %cst_26 = arith.constant dense<0.000000e+00> : vector<16x128xf32>
    %34 = tpu.matmul %32, %33, %cst_26 {dimension_numbers = #tpu.dot_dimension_numbers<[1], [0], [0], [1], [0, 0, 1, 1], [], []>} : vector<16x128xbf16>, vector<128x128xbf16>, vector<16x128xf32> -> vector<16x128xf32>
    %c0_27 = arith.constant 0 : index
    %c0_28 = arith.constant 0 : index
    %35 = vector.load %arg11[%c0_27, %c0_28] : memref<1x128xf32, #tpu.memory_space<vmem>>, vector<1x128xf32>
    %36 = vector.broadcast %35 : vector<1x128xf32> to vector<16x128xf32>
    %37 = arith.addf %34, %36 : vector<16x128xf32>
    %cst_29 = arith.constant 0.000000e+00 : f32
    %38 = vector.broadcast %cst_29 : f32 to vector<16x128xf32>
    %39 = arith.maximumf %37, %38 : vector<16x128xf32>
    %40 = arith.truncf %39 : vector<16x128xf32> to vector<16x128xbf16>
    %c0_30 = arith.constant 0 : index
    %c0_31 = arith.constant 0 : index
    %41 = vector.load %arg12[%c0_30, %c0_31] : memref<128x128xbf16, #tpu.memory_space<vmem>>, vector<128x128xbf16>
    %cst_32 = arith.constant dense<0.000000e+00> : vector<16x128xf32>
    %42 = tpu.matmul %40, %41, %cst_32 {dimension_numbers = #tpu.dot_dimension_numbers<[1], [0], [0], [1], [0, 0, 1, 1], [], []>} : vector<16x128xbf16>, vector<128x128xbf16>, vector<16x128xf32> -> vector<16x128xf32>
    %c0_33 = arith.constant 0 : index
    %c0_34 = arith.constant 0 : index
    %43 = vector.load %arg13[%c0_33, %c0_34] : memref<1x128xf32, #tpu.memory_space<vmem>>, vector<1x128xf32>
    %44 = vector.broadcast %43 : vector<1x128xf32> to vector<16x128xf32>
    %45 = arith.addf %42, %44 : vector<16x128xf32>
    %cst_35 = arith.constant dense<0xFF800000> : vector<16xf32>
    %46 = vector.multi_reduction <maximumf>, %45, %cst_35 [1] : vector<16x128xf32> to vector<16xf32>
    %47 = vector.shape_cast %46 : vector<16xf32> to vector<16x1xf32>
    %48 = vector.broadcast %47 : vector<16x1xf32> to vector<16x128xf32>
    %49 = arith.subf %45, %48 : vector<16x128xf32>
    %50 = math.exp %49 : vector<16x128xf32>
    %cst_36 = arith.constant dense<0.000000e+00> : vector<16xf32>
    %51 = vector.multi_reduction <add>, %50, %cst_36 [1] : vector<16x128xf32> to vector<16xf32>
    %52 = vector.shape_cast %51 : vector<16xf32> to vector<16x1xf32>
    %53 = math.log %52 : vector<16x1xf32>
    %54 = vector.broadcast %53 : vector<16x1xf32> to vector<16x128xf32>
    %55 = arith.subf %49, %54 : vector<16x128xf32>
    %c0_37 = arith.constant 0 : index
    %c0_38 = arith.constant 0 : index
    %56 = vector.load %arg14[%c0_37, %c0_38] : memref<16x128xf32, #tpu.memory_space<vmem>>, vector<16x128xf32>
    tpu.vector_store %arg14[%c0_37, %c0_38], %55 {strides = array<i32>} : memref<16x128xf32, #tpu.memory_space<vmem>>, vector<16x128xf32>,
    return
  }
  func.func @transform_0(%arg0: i32) -> (i32, i32) {
    %c0_i32 = arith.constant 0 : i32
    %c0_i32_0 = arith.constant 0 : i32
    return %arg0, %c0_i32 : i32, i32
  }
  func.func @transform_1(%arg0: i32) -> (i32, i32) {
    %c0_i32 = arith.constant 0 : i32
    %c0_i32_0 = arith.constant 0 : i32
    %c0_i32_1 = arith.constant 0 : i32
    return %c0_i32, %c0_i32_0 : i32, i32
  }
  func.func @transform_2(%arg0: i32) -> (i32, i32) {
    %c0_i32 = arith.constant 0 : i32
    %c0_i32_0 = arith.constant 0 : i32
    %c0_i32_1 = arith.constant 0 : i32
    return %c0_i32, %c0_i32_0 : i32, i32
  }
  func.func @transform_3(%arg0: i32) -> (i32, i32) {
    %c0_i32 = arith.constant 0 : i32
    %c0_i32_0 = arith.constant 0 : i32
    %c0_i32_1 = arith.constant 0 : i32
    return %c0_i32, %c0_i32_0 : i32, i32
  }
  func.func @transform_4(%arg0: i32) -> (i32, i32) {
    %c0_i32 = arith.constant 0 : i32
    %c0_i32_0 = arith.constant 0 : i32
    %c0_i32_1 = arith.constant 0 : i32
    return %c0_i32, %c0_i32_0 : i32, i32
  }
  func.func @transform_5(%arg0: i32) -> (i32, i32) {
    %c0_i32 = arith.constant 0 : i32
    %c0_i32_0 = arith.constant 0 : i32
    %c0_i32_1 = arith.constant 0 : i32
    return %c0_i32, %c0_i32_0 : i32, i32
  }
  func.func @transform_6(%arg0: i32) -> (i32, i32) {
    %c0_i32 = arith.constant 0 : i32
    %c0_i32_0 = arith.constant 0 : i32
    %c0_i32_1 = arith.constant 0 : i32
    return %c0_i32, %c0_i32_0 : i32, i32
  }
  func.func @transform_7(%arg0: i32) -> (i32, i32) {
    %c0_i32 = arith.constant 0 : i32
    %c0_i32_0 = arith.constant 0 : i32
    %c0_i32_1 = arith.constant 0 : i32
    return %c0_i32, %c0_i32_0 : i32, i32
  }
  func.func @transform_8(%arg0: i32) -> (i32, i32) {
    %c0_i32 = arith.constant 0 : i32
    %c0_i32_0 = arith.constant 0 : i32
    %c0_i32_1 = arith.constant 0 : i32
    return %c0_i32, %c0_i32_0 : i32, i32
  }
  func.func @transform_9(%arg0: i32) -> (i32, i32) {
    %c0_i32 = arith.constant 0 : i32
    %c0_i32_0 = arith.constant 0 : i32
    %c0_i32_1 = arith.constant 0 : i32
    return %c0_i32, %c0_i32_0 : i32, i32
  }
  func.func @transform_10(%arg0: i32) -> (i32, i32) {
    %c0_i32 = arith.constant 0 : i32
    %c0_i32_0 = arith.constant 0 : i32
    %c0_i32_1 = arith.constant 0 : i32
    return %c0_i32, %c0_i32_0 : i32, i32
  }
  func.func @transform_11(%arg0: i32) -> (i32, i32) {
    %c0_i32 = arith.constant 0 : i32
    %c0_i32_0 = arith.constant 0 : i32
    %c0_i32_1 = arith.constant 0 : i32
    return %c0_i32, %c0_i32_0 : i32, i32
  }
  func.func @transform_12(%arg0: i32) -> (i32, i32) {
    %c0_i32 = arith.constant 0 : i32
    %c0_i32_0 = arith.constant 0 : i32
    %c0_i32_1 = arith.constant 0 : i32
    return %c0_i32, %c0_i32_0 : i32, i32
  }
  func.func @transform_13(%arg0: i32) -> (i32, i32) {
    %c0_i32 = arith.constant 0 : i32
    %c0_i32_0 = arith.constant 0 : i32
    return %arg0, %c0_i32 : i32, i32
  }
}

</mosaic_0001>

<llo_original>
// kernel: mlp_forward.1
$region0: #{mlp_forward.1}
  #allocation0 [shape = 'u32[]', space=smem, size = 0x4, offset = 0x4, fixed_abs, tag = 'smem constant byte address 0x4 - core index']
  #allocation1 [shape = 'u32[144,128]{1,0:T(1,128)}', space=vmem, size = 0x12000, scoped, tag = 'internal scratch']
  %s0 = inlined_call_operand.vmem [shape: bf16[16,784], index: 0, kind: input, shape index: {}]
  %s1 = inlined_call_operand.vmem [shape: bf16[784,512], index: 1, kind: input, shape index: {}]
  %s2 = inlined_call_operand.vmem [shape: f32[1,512], index: 2, kind: input, shape index: {}]
  %s3 = inlined_call_operand.vmem [shape: bf16[512,256], index: 3, kind: input, shape index: {}]
  %s4 = inlined_call_operand.vmem [shape: f32[1,256], index: 4, kind: input, shape index: {}]
  %s5 = inlined_call_operand.vmem [shape: bf16[256,128], index: 5, kind: input, shape index: {}]
  %s6 = inlined_call_operand.vmem [shape: f32[1,128], index: 6, kind: input, shape index: {}]
  %s7 = inlined_call_operand.vmem [shape: bf16[128,128], index: 7, kind: input, shape index: {}]
  %s8 = inlined_call_operand.vmem [shape: f32[1,128], index: 8, kind: input, shape index: {}]
  %s9 = inlined_call_operand.vmem [shape: bf16[128,128], index: 9, kind: input, shape index: {}]
  %s10 = inlined_call_operand.vmem [shape: f32[1,128], index: 10, kind: input, shape index: {}]
  %s11 = inlined_call_operand.vmem [shape: bf16[128,128], index: 11, kind: input, shape index: {}]
  %s12 = inlined_call_operand.vmem [shape: f32[1,128], index: 12, kind: input, shape index: {}]
  %s13 = inlined_call_operand.vmem [shape: f32[16,128], index: 13, kind: output, shape index: {}]
  %s14 = sld [smem:[#allocation0]]
  $region62: #{mlp_forward.1} parent=0
    _
  %s16 = ssub.s32 1, %s14
  %s17 = scalar_select 0, %s16, %s14
  // Predicated region
  $region2: #{mlp_forward.1} parent=0 // pred_check
    _
  $region3: #{mlp_forward.1} parent=0 // pred_check_branch
    %19 = sbr.rel (0) target = $region5
  $region4: #{mlp_forward.1} parent=0 // pred_region
    _
  $region5: #{mlp_forward.1} parent=0 // pred_fallthru
    _
  // Predicated region
  $region6: #{mlp_forward.1} parent=0 // pred_check
    _
  $region7: #{mlp_forward.1} parent=0 // pred_check_branch
    %21 = sbr.rel (0) target = $region9
  $region8: #{mlp_forward.1} parent=0 // pred_region
    _
  $region9: #{mlp_forward.1} parent=0 // pred_fallthru
    _
  // Predicated region
  $region10: #{mlp_forward.1} parent=0 // pred_check
    _
  $region11: #{mlp_forward.1} parent=0 // pred_check_branch
    %23 = sbr.rel (0) target = $region13
  $region12: #{mlp_forward.1} parent=0 // pred_region
    _
  $region13: #{mlp_forward.1} parent=0 // pred_fallthru
    _
  // Predicated region
  $region14: #{mlp_forward.1} parent=0 // pred_check
    _
  $region15: #{mlp_forward.1} parent=0 // pred_check_branch
    %25 = sbr.rel (0) target = $region17
  $region16: #{mlp_forward.1} parent=0 // pred_region
    _
  $region17: #{mlp_forward.1} parent=0 // pred_fallthru
    _
  // Predicated region
  $region18: #{mlp_forward.1} parent=0 // pred_check
    _
  $region19: #{mlp_forward.1} parent=0 // pred_check_branch
    %27 = sbr.rel (0) target = $region21
  $region20: #{mlp_forward.1} parent=0 // pred_region
    _
  $region21: #{mlp_forward.1} parent=0 // pred_fallthru
    _
  // Predicated region
  $region22: #{mlp_forward.1} parent=0 // pred_check
    _
  $region23: #{mlp_forward.1} parent=0 // pred_check_branch
    %29 = sbr.rel (0) target = $region25
  $region24: #{mlp_forward.1} parent=0 // pred_region
    _
  $region25: #{mlp_forward.1} parent=0 // pred_fallthru
    _
  // Predicated region
  $region26: #{mlp_forward.1} parent=0 // pred_check
    _
  $region27: #{mlp_forward.1} parent=0 // pred_check_branch
    %31 = sbr.rel (0) target = $region29
  $region28: #{mlp_forward.1} parent=0 // pred_region
    _
  $region29: #{mlp_forward.1} parent=0 // pred_fallthru
    _
  // Predicated region
  $region30: #{mlp_forward.1} parent=0 // pred_check
    _
  $region31: #{mlp_forward.1} parent=0 // pred_check_branch
    %33 = sbr.rel (0) target = $region33
  $region32: #{mlp_forward.1} parent=0 // pred_region
    _
  $region33: #{mlp_forward.1} parent=0 // pred_fallthru
    _
  // Predicated region
  $region34: #{mlp_forward.1} parent=0 // pred_check
    _
  $region35: #{mlp_forward.1} parent=0 // pred_check_branch
    %35 = sbr.rel (0) target = $region37
  $region36: #{mlp_forward.1} parent=0 // pred_region
    _
  $region37: #{mlp_forward.1} parent=0 // pred_fallthru
    _
  // Predicated region
  $region38: #{mlp_forward.1} parent=0 // pred_check
    _
  $region39: #{mlp_forward.1} parent=0 // pred_check_branch
    %37 = sbr.rel (0) target = $region41
  $region40: #{mlp_forward.1} parent=0 // pred_region
    _
  $region41: #{mlp_forward.1} parent=0 // pred_fallthru
    _
  // Predicated region
  $region42: #{mlp_forward.1} parent=0 // pred_check
    _
  $region43: #{mlp_forward.1} parent=0 // pred_check_branch
    %39 = sbr.rel (0) target = $region45
  $region44: #{mlp_forward.1} parent=0 // pred_region
    _
  $region45: #{mlp_forward.1} parent=0 // pred_fallthru
    _
  // Predicated region
  $region46: #{mlp_forward.1} parent=0 // pred_check
    _
  $region47: #{mlp_forward.1} parent=0 // pred_check_branch
    %41 = sbr.rel (0) target = $region49
  $region48: #{mlp_forward.1} parent=0 // pred_region
    _
  $region49: #{mlp_forward.1} parent=0 // pred_fallthru
    _
  // Predicated region
  $region50: #{mlp_forward.1} parent=0 // pred_check
    _
  $region51: #{mlp_forward.1} parent=0 // pred_check_branch
    %43 = sbr.rel (0) target = $region53
  $region52: #{mlp_forward.1} parent=0 // pred_region
    _
  $region53: #{mlp_forward.1} parent=0 // pred_fallthru
    _
  %v45 = vld [vmem:[%s0] sm:$0xff]
  %v46 = vld [vmem:[%s0 + $0x8] sm:$0xff]
  %v47 = vld [vmem:[%s0 + $0x10] sm:$0xff]
  %v48 = vld [vmem:[%s0 + $0x18] sm:$0xf]
  %v49 = vld [vmem:[%s0 + $0x1c] sm:$0xff]
  %v50 = vld [vmem:[%s0 + $0x24] sm:$0xff]
  %v51 = vld [vmem:[%s0 + $0x2c] sm:$0xff]
  %v52 = vld [vmem:[%s0 + $0x34] sm:$0xf]
  %v53 = vld [vmem:[%s1] sm:$0xff]
  %v54 = vld [vmem:[%s1 + $0x8] sm:$0xff]
  %v55 = vld [vmem:[%s1 + $0x10] sm:$0xff]
  %v56 = vld [vmem:[%s1 + $0x18] sm:$0xff]
  %v57 = vld [vmem:[%s1 + $0x20] sm:$0xff]
  %v58 = vld [vmem:[%s1 + $0x28] sm:$0xff]
  %v59 = vld [vmem:[%s1 + $0x30] sm:$0xff]
  %v60 = vld [vmem:[%s1 + $0x38] sm:$0xff]
  %v61 = vld [vmem:[%s1 + $0x40] sm:$0xff]
  %v62 = vld [vmem:[%s1 + $0x48] sm:$0xff]
  %v63 = vld [vmem:[%s1 + $0x50] sm:$0xff]
  %v64 = vld [vmem:[%s1 + $0x58] sm:$0xff]
  %v65 = vld [vmem:[%s1 + $0x60] sm:$0xff]
  %v66 = vld [vmem:[%s1 + $0x68] sm:$0xff]
  %v67 = vld [vmem:[%s1 + $0x70] sm:$0xff]
  %v68 = vld [vmem:[%s1 + $0x78] sm:$0xff]
  %v69 = vld [vmem:[%s1 + $0x80] sm:$0xff]
  %v70 = vld [vmem:[%s1 + $0x88] sm:$0xff]
  %v71 = vld [vmem:[%s1 + $0x90] sm:$0xff]
  %v72 = vld [vmem:[%s1 + $0x98] sm:$0xff]
  %v73 = vld [vmem:[%s1 + $0xa0] sm:$0xff]
  %v74 = vld [vmem:[%s1 + $0xa8] sm:$0xff]
  %v75 = vld [vmem:[%s1 + $0xb0] sm:$0xff]
  %v76 = vld [vmem:[%s1 + $0xb8] sm:$0xff]
  %v77 = vld [vmem:[%s1 + $0xc0] sm:$0xff]
  %v78 = vld [vmem:[%s1 + $0xc8] sm:$0xff]
  %v79 = vld [vmem:[%s1 + $0xd0] sm:$0xff]
  %v80 = vld [vmem:[%s1 + $0xd8] sm:$0xff]
  %v81 = vld [vmem:[%s1 + $0xe0] sm:$0xff]
  %v82 = vld [vmem:[%s1 + $0xe8] sm:$0xff]
  %v83 = vld [vmem:[%s1 + $0xf0] sm:$0xff]
  %v84 = vld [vmem:[%s1 + $0xf8] sm:$0xff]
  %v85 = vld [vmem:[%s1 + $0x100] sm:$0xff]
  %v86 = vld [vmem:[%s1 + $0x108] sm:$0xff]
  %v87 = vld [vmem:[%s1 + $0x110] sm:$0xff]
  %v88 = vld [vmem:[%s1 + $0x118] sm:$0xff]
  %v89 = vld [vmem:[%s1 + $0x120] sm:$0xff]
  %v90 = vld [vmem:[%s1 + $0x128] sm:$0xff]
  %v91 = vld [vmem:[%s1 + $0x130] sm:$0xff]
  %v92 = vld [vmem:[%s1 + $0x138] sm:$0xff]
  %v93 = vld [vmem:[%s1 + $0x140] sm:$0xff]
  %v94 = vld [vmem:[%s1 + $0x148] sm:$0xff]
  %v95 = vld [vmem:[%s1 + $0x150] sm:$0xff]
  %v96 = vld [vmem:[%s1 + $0x158] sm:$0xff]
  %v97 = vld [vmem:[%s1 + $0x160] sm:$0xff]
  %v98 = vld [vmem:[%s1 + $0x168] sm:$0xff]
  %v99 = vld [vmem:[%s1 + $0x170] sm:$0xff]
  %v100 = vld [vmem:[%s1 + $0x178] sm:$0xff]
  %v101 = vld [vmem:[%s1 + $0x180] sm:$0xff]
  %v102 = vld [vmem:[%s1 + $0x188] sm:$0xff]
  %v103 = vld [vmem:[%s1 + $0x190] sm:$0xff]
  %v104 = vld [vmem:[%s1 + $0x198] sm:$0xff]
  %v105 = vld [vmem:[%s1 + $0x1a0] sm:$0xff]
  %v106 = vld [vmem:[%s1 + $0x1a8] sm:$0xff]
  %v107 = vld [vmem:[%s1 + $0x1b0] sm:$0xff]
  %v108 = vld [vmem:[%s1 + $0x1b8] sm:$0xff]
  %v109 = vld [vmem:[%s1 + $0x1c0] sm:$0xff]
  %v110 = vld [vmem:[%s1 + $0x1c8] sm:$0xff]
  %v111 = vld [vmem:[%s1 + $0x1d0] sm:$0xff]
  %v112 = vld [vmem:[%s1 + $0x1d8] sm:$0xff]
  %v113 = vld [vmem:[%s1 + $0x1e0] sm:$0xff]
  %v114 = vld [vmem:[%s1 + $0x1e8] sm:$0xff]
  %v115 = vld [vmem:[%s1 + $0x1f0] sm:$0xff]
  %v116 = vld [vmem:[%s1 + $0x1f8] sm:$0xff]
  %v117 = vld [vmem:[%s1 + $0x200] sm:$0xff]
  %v118 = vld [vmem:[%s1 + $0x208] sm:$0xff]
  %v119 = vld [vmem:[%s1 + $0x210] sm:$0xff]
  %v120 = vld [vmem:[%s1 + $0x218] sm:$0xff]
  %v121 = vld [vmem:[%s1 + $0x220] sm:$0xff]
  %v122 = vld [vmem:[%s1 + $0x228] sm:$0xff]
  %v123 = vld [vmem:[%s1 + $0x230] sm:$0xff]
  %v124 = vld [vmem:[%s1 + $0x238] sm:$0xff]
  %v125 = vld [vmem:[%s1 + $0x240] sm:$0xff]
  %v126 = vld [vmem:[%s1 + $0x248] sm:$0xff]
  %v127 = vld [vmem:[%s1 + $0x250] sm:$0xff]
  %v128 = vld [vmem:[%s1 + $0x258] sm:$0xff]
  %v129 = vld [vmem:[%s1 + $0x260] sm:$0xff]
  %v130 = vld [vmem:[%s1 + $0x268] sm:$0xff]
  %v131 = vld [vmem:[%s1 + $0x270] sm:$0xff]
  %v132 = vld [vmem:[%s1 + $0x278] sm:$0xff]
  %v133 = vld [vmem:[%s1 + $0x280] sm:$0xff]
  %v134 = vld [vmem:[%s1 + $0x288] sm:$0xff]
  %v135 = vld [vmem:[%s1 + $0x290] sm:$0xff]
  %v136 = vld [vmem:[%s1 + $0x298] sm:$0xff]
  %v137 = vld [vmem:[%s1 + $0x2a0] sm:$0xff]
  %v138 = vld [vmem:[%s1 + $0x2a8] sm:$0xff]
  %v139 = vld [vmem:[%s1 + $0x2b0] sm:$0xff]
  %v140 = vld [vmem:[%s1 + $0x2b8] sm:$0xff]
  %v141 = vld [vmem:[%s1 + $0x2c0] sm:$0xff]
  %v142 = vld [vmem:[%s1 + $0x2c8] sm:$0xff]
  %v143 = vld [vmem:[%s1 + $0x2d0] sm:$0xff]
  %v144 = vld [vmem:[%s1 + $0x2d8] sm:$0xff]
  %v145 = vld [vmem:[%s1 + $0x2e0] sm:$0xff]
  %v146 = vld [vmem:[%s1 + $0x2e8] sm:$0xff]
  %v147 = vld [vmem:[%s1 + $0x2f0] sm:$0xff]
  %v148 = vld [vmem:[%s1 + $0x2f8] sm:$0xff]
  %v149 = vld [vmem:[%s1 + $0x300] sm:$0xff]
  %v150 = vld [vmem:[%s1 + $0x308] sm:$0xff]
  %v151 = vld [vmem:[%s1 + $0x310] sm:$0xff]
  %v152 = vld [vmem:[%s1 + $0x318] sm:$0xff]
  %v153 = vld [vmem:[%s1 + $0x320] sm:$0xff]
  %v154 = vld [vmem:[%s1 + $0x328] sm:$0xff]
  %v155 = vld [vmem:[%s1 + $0x330] sm:$0xff]
  %v156 = vld [vmem:[%s1 + $0x338] sm:$0xff]
  %v157 = vld [vmem:[%s1 + $0x340] sm:$0xff]
  %v158 = vld [vmem:[%s1 + $0x348] sm:$0xff]
  %v159 = vld [vmem:[%s1 + $0x350] sm:$0xff]
  %v160 = vld [vmem:[%s1 + $0x358] sm:$0xff]
  %v161 = vld [vmem:[%s1 + $0x360] sm:$0xff]
  %v162 = vld [vmem:[%s1 + $0x368] sm:$0xff]
  %v163 = vld [vmem:[%s1 + $0x370] sm:$0xff]
  %v164 = vld [vmem:[%s1 + $0x378] sm:$0xff]
  %v165 = vld [vmem:[%s1 + $0x380] sm:$0xff]
  %v166 = vld [vmem:[%s1 + $0x388] sm:$0xff]
  %v167 = vld [vmem:[%s1 + $0x390] sm:$0xff]
  %v168 = vld [vmem:[%s1 + $0x398] sm:$0xff]
  %v169 = vld [vmem:[%s1 + $0x3a0] sm:$0xff]
  %v170 = vld [vmem:[%s1 + $0x3a8] sm:$0xff]
  %v171 = vld [vmem:[%s1 + $0x3b0] sm:$0xff]
  %v172 = vld [vmem:[%s1 + $0x3b8] sm:$0xff]
  %v173 = vld [vmem:[%s1 + $0x3c0] sm:$0xff]
  %v174 = vld [vmem:[%s1 + $0x3c8] sm:$0xff]
  %v175 = vld [vmem:[%s1 + $0x3d0] sm:$0xff]
  %v176 = vld [vmem:[%s1 + $0x3d8] sm:$0xff]
  %v177 = vld [vmem:[%s1 + $0x3e0] sm:$0xff]
  %v178 = vld [vmem:[%s1 + $0x3e8] sm:$0xff]
  %v179 = vld [vmem:[%s1 + $0x3f0] sm:$0xff]
  %v180 = vld [vmem:[%s1 + $0x3f8] sm:$0xff]
  %v181 = vld [vmem:[%s1 + $0x400] sm:$0xff]
  %v182 = vld [vmem:[%s1 + $0x408] sm:$0xff]
  %v183 = vld [vmem:[%s1 + $0x410] sm:$0xff]
  %v184 = vld [vmem:[%s1 + $0x418] sm:$0xff]
  %v185 = vld [vmem:[%s1 + $0x420] sm:$0xff]
  %v186 = vld [vmem:[%s1 + $0x428] sm:$0xff]
  %v187 = vld [vmem:[%s1 + $0x430] sm:$0xff]
  %v188 = vld [vmem:[%s1 + $0x438] sm:$0xff]
  %v189 = vld [vmem:[%s1 + $0x440] sm:$0xff]
  %v190 = vld [vmem:[%s1 + $0x448] sm:$0xff]
  %v191 = vld [vmem:[%s1 + $0x450] sm:$0xff]
  %v192 = vld [vmem:[%s1 + $0x458] sm:$0xff]
  %v193 = vld [vmem:[%s1 + $0x460] sm:$0xff]
  %v194 = vld [vmem:[%s1 + $0x468] sm:$0xff]
  %v195 = vld [vmem:[%s1 + $0x470] sm:$0xff]
  %v196 = vld [vmem:[%s1 + $0x478] sm:$0xff]
  %v197 = vld [vmem:[%s1 + $0x480] sm:$0xff]
  %v198 = vld [vmem:[%s1 + $0x488] sm:$0xff]
  %v199 = vld [vmem:[%s1 + $0x490] sm:$0xff]
  %v200 = vld [vmem:[%s1 + $0x498] sm:$0xff]
  %v201 = vld [vmem:[%s1 + $0x4a0] sm:$0xff]
  %v202 = vld [vmem:[%s1 + $0x4a8] sm:$0xff]
  %v203 = vld [vmem:[%s1 + $0x4b0] sm:$0xff]
  %v204 = vld [vmem:[%s1 + $0x4b8] sm:$0xff]
  %v205 = vld [vmem:[%s1 + $0x4c0] sm:$0xff]
  %v206 = vld [vmem:[%s1 + $0x4c8] sm:$0xff]
  %v207 = vld [vmem:[%s1 + $0x4d0] sm:$0xff]
  %v208 = vld [vmem:[%s1 + $0x4d8] sm:$0xff]
  %v209 = vld [vmem:[%s1 + $0x4e0] sm:$0xff]
  %v210 = vld [vmem:[%s1 + $0x4e8] sm:$0xff]
  %v211 = vld [vmem:[%s1 + $0x4f0] sm:$0xff]
  %v212 = vld [vmem:[%s1 + $0x4f8] sm:$0xff]
  %v213 = vld [vmem:[%s1 + $0x500] sm:$0xff]
  %v214 = vld [vmem:[%s1 + $0x508] sm:$0xff]
  %v215 = vld [vmem:[%s1 + $0x510] sm:$0xff]
  %v216 = vld [vmem:[%s1 + $0x518] sm:$0xff]
  %v217 = vld [vmem:[%s1 + $0x520] sm:$0xff]
  %v218 = vld [vmem:[%s1 + $0x528] sm:$0xff]
  %v219 = vld [vmem:[%s1 + $0x530] sm:$0xff]
  %v220 = vld [vmem:[%s1 + $0x538] sm:$0xff]
  %v221 = vld [vmem:[%s1 + $0x540] sm:$0xff]
  %v222 = vld [vmem:[%s1 + $0x548] sm:$0xff]
  %v223 = vld [vmem:[%s1 + $0x550] sm:$0xff]
  %v224 = vld [vmem:[%s1 + $0x558] sm:$0xff]
  %v225 = vld [vmem:[%s1 + $0x560] sm:$0xff]
  %v226 = vld [vmem:[%s1 + $0x568] sm:$0xff]
  %v227 = vld [vmem:[%s1 + $0x570] sm:$0xff]
  %v228 = vld [vmem:[%s1 + $0x578] sm:$0xff]
  %v229 = vld [vmem:[%s1 + $0x580] sm:$0xff]
  %v230 = vld [vmem:[%s1 + $0x588] sm:$0xff]
  %v231 = vld [vmem:[%s1 + $0x590] sm:$0xff]
  %v232 = vld [vmem:[%s1 + $0x598] sm:$0xff]
  %v233 = vld [vmem:[%s1 + $0x5a0] sm:$0xff]
  %v234 = vld [vmem:[%s1 + $0x5a8] sm:$0xff]
  %v235 = vld [vmem:[%s1 + $0x5b0] sm:$0xff]
  %v236 = vld [vmem:[%s1 + $0x5b8] sm:$0xff]
  %v237 = vld [vmem:[%s1 + $0x5c0] sm:$0xff]
  %v238 = vld [vmem:[%s1 + $0x5c8] sm:$0xff]
  %v239 = vld [vmem:[%s1 + $0x5d0] sm:$0xff]
  %v240 = vld [vmem:[%s1 + $0x5d8] sm:$0xff]
  %v241 = vld [vmem:[%s1 + $0x5e0] sm:$0xff]
  %v242 = vld [vmem:[%s1 + $0x5e8] sm:$0xff]
  %v243 = vld [vmem:[%s1 + $0x5f0] sm:$0xff]
  %v244 = vld [vmem:[%s1 + $0x5f8] sm:$0xff]
  %v245 = vld [vmem:[%s1 + $0x600] sm:$0xff]
  %v246 = vld [vmem:[%s1 + $0x608] sm:$0xff]
  %v247 = vld [vmem:[%s1 + $0x610] sm:$0xff]
  %v248 = vld [vmem:[%s1 + $0x618] sm:$0xff]
  %v249 = vld [vmem:[%s2] sm:$0xf]
  %v251 = vlaneseq
  %v252 = vshrl.u32 %v251, 7
  %v253 = vsub.s32 0, %v252
  %v254 = vrot.slane %v249, %v253
  %v255 = vlaneseq
  %v256 = vshrl.u32 %v255, 7
  %v257 = vsub.s32 1, %v256
  %v258 = vrot.slane %v249, %v257
  %v259 = vlaneseq
  %v260 = vshrl.u32 %v259, 7
  %v261 = vsub.s32 2, %v260
  %v262 = vrot.slane %v249, %v261
  %v263 = vlaneseq
  %v264 = vshrl.u32 %v263, 7
  %v265 = vsub.s32 3, %v264
  %v266 = vrot.slane %v249, %v265
  %v279 = vunpack.c.l.b16 %v45
  %v280 = vunpack.c.h.b16 %v45
  %v281 = vunpack.c.l.b16 %v46
  %v282 = vunpack.c.h.b16 %v46
  %v283 = vunpack.c.l.b16 %v47
  %v284 = vunpack.c.h.b16 %v47
  %v285 = vunpack.c.l.b16 %v48
  %v286 = vunpack.c.l.b16 %v49
  %v287 = vunpack.c.h.b16 %v49
  %v288 = vunpack.c.l.b16 %v50
  %v289 = vunpack.c.h.b16 %v50
  %v290 = vunpack.c.l.b16 %v51
  %v291 = vunpack.c.h.b16 %v51
  %v292 = vunpack.c.l.b16 %v52
  %v293 = vpack.c.b16 %v286, %v279
  %v294 = vpack.c.b16 %v287, %v280
  %v295 = vpack.c.b16 %v288, %v281
  %v296 = vpack.c.b16 %v289, %v282
  %v297 = vpack.c.b16 %v290, %v283
  %v298 = vpack.c.b16 %v291, %v284
  %v299 = vpack.c.b16 %v292, %v285
  %v502 = vunpack.c.l.b16 %v53
  %v503 = vunpack.c.h.b16 %v53
  %v504 = vunpack.c.l.b16 %v54
  %v505 = vunpack.c.h.b16 %v54
  %v506 = vunpack.c.l.b16 %v55
  %v507 = vunpack.c.h.b16 %v55
  %v508 = vunpack.c.l.b16 %v56
  %v509 = vunpack.c.h.b16 %v56
  %v510 = vunpack.c.l.b16 %v57
  %v511 = vunpack.c.h.b16 %v57
  %v512 = vunpack.c.l.b16 %v58
  %v513 = vunpack.c.h.b16 %v58
  %v514 = vunpack.c.l.b16 %v59
  %v515 = vunpack.c.h.b16 %v59
  %v516 = vunpack.c.l.b16 %v60
  %v517 = vunpack.c.h.b16 %v60
  %v518 = vunpack.c.l.b16 %v61
  %v519 = vunpack.c.h.b16 %v61
  %v520 = vunpack.c.l.b16 %v62
  %v521 = vunpack.c.h.b16 %v62
  %v522 = vunpack.c.l.b16 %v63
  %v523 = vunpack.c.h.b16 %v63
  %v524 = vunpack.c.l.b16 %v64
  %v525 = vunpack.c.h.b16 %v64
  %v526 = vunpack.c.l.b16 %v65
  %v527 = vunpack.c.h.b16 %v65
  %v528 = vunpack.c.l.b16 %v66
  %v529 = vunpack.c.h.b16 %v66
  %v530 = vunpack.c.l.b16 %v67
  %v531 = vunpack.c.h.b16 %v67
  %v532 = vunpack.c.l.b16 %v68
  %v533 = vunpack.c.h.b16 %v68
  %v534 = vunpack.c.l.b16 %v69
  %v535 = vunpack.c.h.b16 %v69
  %v536 = vunpack.c.l.b16 %v70
  %v537 = vunpack.c.h.b16 %v70
  %v538 = vunpack.c.l.b16 %v71
  %v539 = vunpack.c.h.b16 %v71
  %v540 = vunpack.c.l.b16 %v72
  %v541 = vunpack.c.h.b16 %v72
  %v542 = vunpack.c.l.b16 %v73
  %v543 = vunpack.c.h.b16 %v73
  %v544 = vunpack.c.l.b16 %v74
  %v545 = vunpack.c.h.b16 %v74
  %v546 = vunpack.c.l.b16 %v75
  %v547 = vunpack.c.h.b16 %v75
  %v548 = vunpack.c.l.b16 %v76
  %v549 = vunpack.c.h.b16 %v76
  %v550 = vunpack.c.l.b16 %v77
  %v551 = vunpack.c.h.b16 %v77
  %v552 = vunpack.c.l.b16 %v78
  %v553 = vunpack.c.h.b16 %v78
  %v554 = vunpack.c.l.b16 %v79
  %v555 = vunpack.c.h.b16 %v79
  %v556 = vunpack.c.l.b16 %v80
  %v557 = vunpack.c.h.b16 %v80
  %v558 = vunpack.c.l.b16 %v81
  %v559 = vunpack.c.h.b16 %v81
  %v560 = vunpack.c.l.b16 %v82
  %v561 = vunpack.c.h.b16 %v82
  %v562 = vunpack.c.l.b16 %v83
  %v563 = vunpack.c.h.b16 %v83
  %v564 = vunpack.c.l.b16 %v84
  %v565 = vunpack.c.h.b16 %v84
  %v566 = vunpack.c.l.b16 %v85
  %v567 = vunpack.c.h.b16 %v85
  %v568 = vunpack.c.l.b16 %v86
  %v569 = vunpack.c.h.b16 %v86
  %v570 = vunpack.c.l.b16 %v87
  %v571 = vunpack.c.h.b16 %v87
  %v572 = vunpack.c.l.b16 %v88
  %v573 = vunpack.c.h.b16 %v88
  %v574 = vunpack.c.l.b16 %v89
  %v575 = vunpack.c.h.b16 %v89
  %v576 = vunpack.c.l.b16 %v90
  %v577 = vunpack.c.h.b16 %v90
  %v578 = vunpack.c.l.b16 %v91
  %v579 = vunpack.c.h.b16 %v91
  %v580 = vunpack.c.l.b16 %v92
  %v581 = vunpack.c.h.b16 %v92
  %v582 = vunpack.c.l.b16 %v93
  %v583 = vunpack.c.h.b16 %v93
  %v584 = vunpack.c.l.b16 %v94
  %v585 = vunpack.c.h.b16 %v94
  %v586 = vunpack.c.l.b16 %v95
  %v587 = vunpack.c.h.b16 %v95
  %v588 = vunpack.c.l.b16 %v96
  %v589 = vunpack.c.h.b16 %v96
  %v590 = vunpack.c.l.b16 %v97
  %v591 = vunpack.c.h.b16 %v97
  %v592 = vunpack.c.l.b16 %v98
  %v593 = vunpack.c.h.b16 %v98
  %v594 = vunpack.c.l.b16 %v99
  %v595 = vunpack.c.h.b16 %v99
  %v596 = vunpack.c.l.b16 %v100
  %v597 = vunpack.c.h.b16 %v100
  %v598 = vunpack.c.l.b16 %v101
  %v599 = vunpack.c.h.b16 %v101
  %v600 = vunpack.c.l.b16 %v102
  %v601 = vunpack.c.h.b16 %v102
  %v602 = vunpack.c.l.b16 %v103
  %v603 = vunpack.c.h.b16 %v103
  %v604 = vunpack.c.l.b16 %v104
  %v605 = vunpack.c.h.b16 %v104
  %v606 = vunpack.c.l.b16 %v105
  %v607 = vunpack.c.h.b16 %v105
  %v608 = vunpack.c.l.b16 %v106
  %v609 = vunpack.c.h.b16 %v106
  %v610 = vunpack.c.l.b16 %v107
  %v611 = vunpack.c.h.b16 %v107
  %v612 = vunpack.c.l.b16 %v108
  %v613 = vunpack.c.h.b16 %v108
  %v614 = vunpack.c.l.b16 %v109
  %v615 = vunpack.c.h.b16 %v109
  %v616 = vunpack.c.l.b16 %v110
  %v617 = vunpack.c.h.b16 %v110
  %v618 = vunpack.c.l.b16 %v111
  %v619 = vunpack.c.h.b16 %v111
  %v620 = vunpack.c.l.b16 %v112
  %v621 = vunpack.c.h.b16 %v112
  %v622 = vunpack.c.l.b16 %v113
  %v623 = vunpack.c.h.b16 %v113
  %v624 = vunpack.c.l.b16 %v114
  %v625 = vunpack.c.h.b16 %v114
  %v626 = vunpack.c.l.b16 %v115
  %v627 = vunpack.c.h.b16 %v115
  %v628 = vunpack.c.l.b16 %v116
  %v629 = vunpack.c.h.b16 %v116
  %v630 = vunpack.c.l.b16 %v117
  %v631 = vunpack.c.h.b16 %v117
  %v632 = vunpack.c.l.b16 %v118
  %v633 = vunpack.c.h.b16 %v118
  %v634 = vunpack.c.l.b16 %v119
  %v635 = vunpack.c.h.b16 %v119
  %v636 = vunpack.c.l.b16 %v120
  %v637 = vunpack.c.h.b16 %v120
  %v638 = vunpack.c.l.b16 %v121
  %v639 = vunpack.c.h.b16 %v121
  %v640 = vunpack.c.l.b16 %v122
  %v641 = vunpack.c.h.b16 %v122
  %v642 = vunpack.c.l.b16 %v123
  %v643 = vunpack.c.h.b16 %v123
  %v644 = vunpack.c.l.b16 %v124
  %v645 = vunpack.c.h.b16 %v124
  %v646 = vunpack.c.l.b16 %v125
  %v647 = vunpack.c.h.b16 %v125
  %v648 = vunpack.c.l.b16 %v126
  %v649 = vunpack.c.h.b16 %v126
  %v650 = vunpack.c.l.b16 %v127
  %v651 = vunpack.c.h.b16 %v127
  %v652 = vunpack.c.l.b16 %v128
  %v653 = vunpack.c.h.b16 %v128
  %v654 = vunpack.c.l.b16 %v129
  %v655 = vunpack.c.h.b16 %v129
  %v656 = vunpack.c.l.b16 %v130
  %v657 = vunpack.c.h.b16 %v130
  %v658 = vunpack.c.l.b16 %v131
  %v659 = vunpack.c.h.b16 %v131
  %v660 = vunpack.c.l.b16 %v132
  %v661 = vunpack.c.h.b16 %v132
  %v662 = vunpack.c.l.b16 %v133
  %v663 = vunpack.c.h.b16 %v133
  %v664 = vunpack.c.l.b16 %v134
  %v665 = vunpack.c.h.b16 %v134
  %v666 = vunpack.c.l.b16 %v135
  %v667 = vunpack.c.h.b16 %v135
  %v668 = vunpack.c.l.b16 %v136
  %v669 = vunpack.c.h.b16 %v136
  %v670 = vunpack.c.l.b16 %v137
  %v671 = vunpack.c.h.b16 %v137
  %v672 = vunpack.c.l.b16 %v138
  %v673 = vunpack.c.h.b16 %v138
  %v674 = vunpack.c.l.b16 %v139
  %v675 = vunpack.c.h.b16 %v139
  %v676 = vunpack.c.l.b16 %v140
  %v677 = vunpack.c.h.b16 %v140
  %v678 = vunpack.c.l.b16 %v141
  %v679 = vunpack.c.h.b16 %v141
  %v680 = vunpack.c.l.b16 %v142
  %v681 = vunpack.c.h.b16 %v142
  %v682 = vunpack.c.l.b16 %v143
  %v683 = vunpack.c.h.b16 %v143
  %v684 = vunpack.c.l.b16 %v144
  %v685 = vunpack.c.h.b16 %v144
  %v686 = vunpack.c.l.b16 %v145
  %v687 = vunpack.c.h.b16 %v145
  %v688 = vunpack.c.l.b16 %v146
  %v689 = vunpack.c.h.b16 %v146
  %v690 = vunpack.c.l.b16 %v147
  %v691 = vunpack.c.h.b16 %v147
  %v692 = vunpack.c.l.b16 %v148
  %v693 = vunpack.c.h.b16 %v148
  %v694 = vunpack.c.l.b16 %v149
  %v695 = vunpack.c.h.b16 %v149
  %v696 = vunpack.c.l.b16 %v150
  %v697 = vunpack.c.h.b16 %v150
  %v698 = vunpack.c.l.b16 %v151
  %v699 = vunpack.c.h.b16 %v151
  %v700 = vunpack.c.l.b16 %v152
  %v701 = vunpack.c.h.b16 %v152
  %v702 = vunpack.c.l.b16 %v153
  %v703 = vunpack.c.h.b16 %v153
  %v704 = vunpack.c.l.b16 %v154
  %v705 = vunpack.c.h.b16 %v154
  %v706 = vunpack.c.l.b16 %v155
  %v707 = vunpack.c.h.b16 %v155
  %v708 = vunpack.c.l.b16 %v156
  %v709 = vunpack.c.h.b16 %v156
  %v710 = vunpack.c.l.b16 %v157
  %v711 = vunpack.c.h.b16 %v157
  %v712 = vunpack.c.l.b16 %v158
  %v713 = vunpack.c.h.b16 %v158
  %v714 = vunpack.c.l.b16 %v159
  %v715 = vunpack.c.h.b16 %v159
  %v716 = vunpack.c.l.b16 %v160
  %v717 = vunpack.c.h.b16 %v160
  %v718 = vunpack.c.l.b16 %v161
  %v719 = vunpack.c.h.b16 %v161
  %v720 = vunpack.c.l.b16 %v162
  %v721 = vunpack.c.h.b16 %v162
  %v722 = vunpack.c.l.b16 %v163
  %v723 = vunpack.c.h.b16 %v163
  %v724 = vunpack.c.l.b16 %v164
  %v725 = vunpack.c.h.b16 %v164
  %v726 = vunpack.c.l.b16 %v165
  %v727 = vunpack.c.h.b16 %v165
  %v728 = vunpack.c.l.b16 %v166
  %v729 = vunpack.c.h.b16 %v166
  %v730 = vunpack.c.l.b16 %v167
  %v731 = vunpack.c.h.b16 %v167
  %v732 = vunpack.c.l.b16 %v168
  %v733 = vunpack.c.h.b16 %v168
  %v734 = vunpack.c.l.b16 %v169
  %v735 = vunpack.c.h.b16 %v169
  %v736 = vunpack.c.l.b16 %v170
  %v737 = vunpack.c.h.b16 %v170
  %v738 = vunpack.c.l.b16 %v171
  %v739 = vunpack.c.h.b16 %v171
  %v740 = vunpack.c.l.b16 %v172
  %v741 = vunpack.c.h.b16 %v172
  %v742 = vunpack.c.l.b16 %v173
  %v743 = vunpack.c.h.b16 %v173
  %v744 = vunpack.c.l.b16 %v174
  %v745 = vunpack.c.h.b16 %v174
  %v746 = vunpack.c.l.b16 %v175
  %v747 = vunpack.c.h.b16 %v175
  %v748 = vunpack.c.l.b16 %v176
  %v749 = vunpack.c.h.b16 %v176
  %v750 = vunpack.c.l.b16 %v177
  %v751 = vunpack.c.h.b16 %v177
  %v752 = vunpack.c.l.b16 %v178
  %v753 = vunpack.c.h.b16 %v178
  %v754 = vunpack.c.l.b16 %v179
  %v755 = vunpack.c.h.b16 %v179
  %v756 = vunpack.c.l.b16 %v180
  %v757 = vunpack.c.h.b16 %v180
  %v758 = vunpack.c.l.b16 %v181
  %v759 = vunpack.c.h.b16 %v181
  %v760 = vunpack.c.l.b16 %v182
  %v761 = vunpack.c.h.b16 %v182
  %v762 = vunpack.c.l.b16 %v183
  %v763 = vunpack.c.h.b16 %v183
  %v764 = vunpack.c.l.b16 %v184
  %v765 = vunpack.c.h.b16 %v184
  %v766 = vunpack.c.l.b16 %v185
  %v767 = vunpack.c.h.b16 %v185
  %v768 = vunpack.c.l.b16 %v186
  %v769 = vunpack.c.h.b16 %v186
  %v770 = vunpack.c.l.b16 %v187
  %v771 = vunpack.c.h.b16 %v187
  %v772 = vunpack.c.l.b16 %v188
  %v773 = vunpack.c.h.b16 %v188
  %v774 = vunpack.c.l.b16 %v189
  %v775 = vunpack.c.h.b16 %v189
  %v776 = vunpack.c.l.b16 %v190
  %v777 = vunpack.c.h.b16 %v190
  %v778 = vunpack.c.l.b16 %v191
  %v779 = vunpack.c.h.b16 %v191
  %v780 = vunpack.c.l.b16 %v192
  %v781 = vunpack.c.h.b16 %v192
  %v782 = vunpack.c.l.b16 %v193
  %v783 = vunpack.c.h.b16 %v193
  %v784 = vunpack.c.l.b16 %v194
  %v785 = vunpack.c.h.b16 %v194
  %v786 = vunpack.c.l.b16 %v195
  %v787 = vunpack.c.h.b16 %v195
  %v788 = vunpack.c.l.b16 %v196
  %v789 = vunpack.c.h.b16 %v196
  %v790 = vunpack.c.l.b16 %v197
  %v791 = vunpack.c.h.b16 %v197
  %v792 = vunpack.c.l.b16 %v198
  %v793 = vunpack.c.h.b16 %v198
  %v794 = vunpack.c.l.b16 %v199
  %v795 = vunpack.c.h.b16 %v199
  %v796 = vunpack.c.l.b16 %v200
  %v797 = vunpack.c.h.b16 %v200
  %v798 = vunpack.c.l.b16 %v201
  %v799 = vunpack.c.h.b16 %v201
  %v800 = vunpack.c.l.b16 %v202
  %v801 = vunpack.c.h.b16 %v202
  %v802 = vunpack.c.l.b16 %v203
  %v803 = vunpack.c.h.b16 %v203
  %v804 = vunpack.c.l.b16 %v204
  %v805 = vunpack.c.h.b16 %v204
  %v806 = vunpack.c.l.b16 %v205
  %v807 = vunpack.c.h.b16 %v205
  %v808 = vunpack.c.l.b16 %v206
  %v809 = vunpack.c.h.b16 %v206
  %v810 = vunpack.c.l.b16 %v207
  %v811 = vunpack.c.h.b16 %v207
  %v812 = vunpack.c.l.b16 %v208
  %v813 = vunpack.c.h.b16 %v208
  %v814 = vunpack.c.l.b16 %v209
  %v815 = vunpack.c.h.b16 %v209
  %v816 = vunpack.c.l.b16 %v210
  %v817 = vunpack.c.h.b16 %v210
  %v818 = vunpack.c.l.b16 %v211
  %v819 = vunpack.c.h.b16 %v211
  %v820 = vunpack.c.l.b16 %v212
  %v821 = vunpack.c.h.b16 %v212
  %v822 = vunpack.c.l.b16 %v213
  %v823 = vunpack.c.h.b16 %v213
  %v824 = vunpack.c.l.b16 %v214
  %v825 = vunpack.c.h.b16 %v214
  %v826 = vunpack.c.l.b16 %v215
  %v827 = vunpack.c.h.b16 %v215
  %v828 = vunpack.c.l.b16 %v216
  %v829 = vunpack.c.h.b16 %v216
  %v830 = vunpack.c.l.b16 %v217
  %v831 = vunpack.c.h.b16 %v217
  %v832 = vunpack.c.l.b16 %v218
  %v833 = vunpack.c.h.b16 %v218
  %v834 = vunpack.c.l.b16 %v219
  %v835 = vunpack.c.h.b16 %v219
  %v836 = vunpack.c.l.b16 %v220
  %v837 = vunpack.c.h.b16 %v220
  %v838 = vunpack.c.l.b16 %v221
  %v839 = vunpack.c.h.b16 %v221
  %v840 = vunpack.c.l.b16 %v222
  %v841 = vunpack.c.h.b16 %v222
  %v842 = vunpack.c.l.b16 %v223
  %v843 = vunpack.c.h.b16 %v223
  %v844 = vunpack.c.l.b16 %v224
  %v845 = vunpack.c.h.b16 %v224
  %v846 = vunpack.c.l.b16 %v225
  %v847 = vunpack.c.h.b16 %v225
  %v848 = vunpack.c.l.b16 %v226
  %v849 = vunpack.c.h.b16 %v226
  %v850 = vunpack.c.l.b16 %v227
  %v851 = vunpack.c.h.b16 %v227
  %v852 = vunpack.c.l.b16 %v228
  %v853 = vunpack.c.h.b16 %v228
  %v854 = vunpack.c.l.b16 %v229
  %v855 = vunpack.c.h.b16 %v229
  %v856 = vunpack.c.l.b16 %v230
  %v857 = vunpack.c.h.b16 %v230
  %v858 = vunpack.c.l.b16 %v231
  %v859 = vunpack.c.h.b16 %v231
  %v860 = vunpack.c.l.b16 %v232
  %v861 = vunpack.c.h.b16 %v232
  %v862 = vunpack.c.l.b16 %v233
  %v863 = vunpack.c.h.b16 %v233
  %v864 = vunpack.c.l.b16 %v234
  %v865 = vunpack.c.h.b16 %v234
  %v866 = vunpack.c.l.b16 %v235
  %v867 = vunpack.c.h.b16 %v235
  %v868 = vunpack.c.l.b16 %v236
  %v869 = vunpack.c.h.b16 %v236
  %v870 = vunpack.c.l.b16 %v237
  %v871 = vunpack.c.h.b16 %v237
  %v872 = vunpack.c.l.b16 %v238
  %v873 = vunpack.c.h.b16 %v238
  %v874 = vunpack.c.l.b16 %v239
  %v875 = vunpack.c.h.b16 %v239
  %v876 = vunpack.c.l.b16 %v240
  %v877 = vunpack.c.h.b16 %v240
  %v878 = vunpack.c.l.b16 %v241
  %v879 = vunpack.c.h.b16 %v241
  %v880 = vunpack.c.l.b16 %v242
  %v881 = vunpack.c.h.b16 %v242
  %v882 = vunpack.c.l.b16 %v243
  %v883 = vunpack.c.h.b16 %v243
  %v884 = vunpack.c.l.b16 %v244
  %v885 = vunpack.c.h.b16 %v244
  %v886 = vunpack.c.l.b16 %v245
  %v887 = vunpack.c.h.b16 %v245
  %v888 = vunpack.c.l.b16 %v246
  %v889 = vunpack.c.h.b16 %v246
  %v890 = vunpack.c.l.b16 %v247
  %v891 = vunpack.c.h.b16 %v247
  %v892 = vunpack.c.l.b16 %v248
  %v893 = vunpack.c.h.b16 %v248
  %v894 = vpack.c.b16 %v506, %v502
  %v895 = vpack.c.b16 %v507, %v503
  %v896 = vpack.c.b16 %v508, %v504
  %v897 = vpack.c.b16 %v509, %v505
  %v898 = vpack.c.b16 %v514, %v510
  %v899 = vpack.c.b16 %v515, %v511
  %v900 = vpack.c.b16 %v516, %v512
  %v901 = vpack.c.b16 %v517, %v513
  %v902 = vpack.c.b16 %v522, %v518
  %v903 = vpack.c.b16 %v523, %v519
  %v904 = vpack.c.b16 %v524, %v520
  %v905 = vpack.c.b16 %v525, %v521
  %v906 = vpack.c.b16 %v530, %v526
  %v907 = vpack.c.b16 %v531, %v527
  %v908 = vpack.c.b16 %v532, %v528
  %v909 = vpack.c.b16 %v533, %v529
  %v910 = vpack.c.b16 %v538, %v534
  %v911 = vpack.c.b16 %v539, %v535
  %v912 = vpack.c.b16 %v540, %v536
  %v913 = vpack.c.b16 %v541, %v537
  %v914 = vpack.c.b16 %v546, %v542
  %v915 = vpack.c.b16 %v547, %v543
  %v916 = vpack.c.b16 %v548, %v544
  %v917 = vpack.c.b16 %v549, %v545
  %v918 = vpack.c.b16 %v554, %v550
  %v919 = vpack.c.b16 %v555, %v551
  %v920 = vpack.c.b16 %v556, %v552
  %v921 = vpack.c.b16 %v557, %v553
  %v922 = vpack.c.b16 %v562, %v558
  %v923 = vpack.c.b16 %v563, %v559
  %v924 = vpack.c.b16 %v564, %v560
  %v925 = vpack.c.b16 %v565, %v561
  %v926 = vpack.c.b16 %v570, %v566
  %v927 = vpack.c.b16 %v571, %v567
  %v928 = vpack.c.b16 %v572, %v568
  %v929 = vpack.c.b16 %v573, %v569
  %v930 = vpack.c.b16 %v578, %v574
  %v931 = vpack.c.b16 %v579, %v575
  %v932 = vpack.c.b16 %v580, %v576
  %v933 = vpack.c.b16 %v581, %v577
  %v934 = vpack.c.b16 %v586, %v582
  %v935 = vpack.c.b16 %v587, %v583
  %v936 = vpack.c.b16 %v588, %v584
  %v937 = vpack.c.b16 %v589, %v585
  %v938 = vpack.c.b16 %v594, %v590
  %v939 = vpack.c.b16 %v595, %v591
  %v940 = vpack.c.b16 %v596, %v592
  %v941 = vpack.c.b16 %v597, %v593
  %v942 = vpack.c.b16 %v602, %v598
  %v943 = vpack.c.b16 %v603, %v599
  %v944 = vpack.c.b16 %v604, %v600
  %v945 = vpack.c.b16 %v605, %v601
  %v946 = vpack.c.b16 %v610, %v606
  %v947 = vpack.c.b16 %v611, %v607
  %v948 = vpack.c.b16 %v612, %v608
  %v949 = vpack.c.b16 %v613, %v609
  %v950 = vpack.c.b16 %v618, %v614
  %v951 = vpack.c.b16 %v619, %v615
  %v952 = vpack.c.b16 %v620, %v616
  %v953 = vpack.c.b16 %v621, %v617
  %v954 = vpack.c.b16 %v626, %v622
  %v955 = vpack.c.b16 %v627, %v623
  %v956 = vpack.c.b16 %v628, %v624
  %v957 = vpack.c.b16 %v629, %v625
  %v958 = vpack.c.b16 %v634, %v630
  %v959 = vpack.c.b16 %v635, %v631
  %v960 = vpack.c.b16 %v636, %v632
  %v961 = vpack.c.b16 %v637, %v633
  %v962 = vpack.c.b16 %v642, %v638
  %v963 = vpack.c.b16 %v643, %v639
  %v964 = vpack.c.b16 %v644, %v640
  %v965 = vpack.c.b16 %v645, %v641
  %v966 = vpack.c.b16 %v650, %v646
  %v967 = vpack.c.b16 %v651, %v647
  %v968 = vpack.c.b16 %v652, %v648
  %v969 = vpack.c.b16 %v653, %v649
  %v970 = vpack.c.b16 %v658, %v654
  %v971 = vpack.c.b16 %v659, %v655
  %v972 = vpack.c.b16 %v660, %v656
  %v973 = vpack.c.b16 %v661, %v657
  %v974 = vpack.c.b16 %v666, %v662
  %v975 = vpack.c.b16 %v667, %v663
  %v976 = vpack.c.b16 %v668, %v664
  %v977 = vpack.c.b16 %v669, %v665
  %v978 = vpack.c.b16 %v674, %v670
  %v979 = vpack.c.b16 %v675, %v671
  %v980 = vpack.c.b16 %v676, %v672
  %v981 = vpack.c.b16 %v677, %v673
  %v982 = vpack.c.b16 %v682, %v678
  %v983 = vpack.c.b16 %v683, %v679
  %v984 = vpack.c.b16 %v684, %v680
  %v985 = vpack.c.b16 %v685, %v681
  %v986 = vpack.c.b16 %v690, %v686
  %v987 = vpack.c.b16 %v691, %v687
  %v988 = vpack.c.b16 %v692, %v688
  %v989 = vpack.c.b16 %v693, %v689
  %v990 = vpack.c.b16 %v698, %v694
  %v991 = vpack.c.b16 %v699, %v695
  %v992 = vpack.c.b16 %v700, %v696
  %v993 = vpack.c.b16 %v701, %v697
  %v994 = vpack.c.b16 %v706, %v702
  %v995 = vpack.c.b16 %v707, %v703
  %v996 = vpack.c.b16 %v708, %v704
  %v997 = vpack.c.b16 %v709, %v705
  %v998 = vpack.c.b16 %v714, %v710
  %v999 = vpack.c.b16 %v715, %v711
  %v1000 = vpack.c.b16 %v716, %v712
  %v1001 = vpack.c.b16 %v717, %v713
  %v1002 = vpack.c.b16 %v722, %v718
  %v1003 = vpack.c.b16 %v723, %v719
  %v1004 = vpack.c.b16 %v724, %v720
  %v1005 = vpack.c.b16 %v725, %v721
  %v1006 = vpack.c.b16 %v730, %v726
  %v1007 = vpack.c.b16 %v731, %v727
  %v1008 = vpack.c.b16 %v732, %v728
  %v1009 = vpack.c.b16 %v733, %v729
  %v1010 = vpack.c.b16 %v738, %v734
  %v1011 = vpack.c.b16 %v739, %v735
  %v1012 = vpack.c.b16 %v740, %v736
  %v1013 = vpack.c.b16 %v741, %v737
  %v1014 = vpack.c.b16 %v746, %v742
  %v1015 = vpack.c.b16 %v747, %v743
  %v1016 = vpack.c.b16 %v748, %v744
  %v1017 = vpack.c.b16 %v749, %v745
  %v1018 = vpack.c.b16 %v754, %v750
  %v1019 = vpack.c.b16 %v755, %v751
  %v1020 = vpack.c.b16 %v756, %v752
  %v1021 = vpack.c.b16 %v757, %v753
  %v1022 = vpack.c.b16 %v762, %v758
  %v1023 = vpack.c.b16 %v763, %v759
  %v1024 = vpack.c.b16 %v764, %v760
  %v1025 = vpack.c.b16 %v765, %v761
  %v1026 = vpack.c.b16 %v770, %v766
  %v1027 = vpack.c.b16 %v771, %v767
  %v1028 = vpack.c.b16 %v772, %v768
  %v1029 = vpack.c.b16 %v773, %v769
  %v1030 = vpack.c.b16 %v778, %v774
  %v1031 = vpack.c.b16 %v779, %v775
  %v1032 = vpack.c.b16 %v780, %v776
  %v1033 = vpack.c.b16 %v781, %v777
  %v1034 = vpack.c.b16 %v786, %v782
  %v1035 = vpack.c.b16 %v787, %v783
  %v1036 = vpack.c.b16 %v788, %v784
  %v1037 = vpack.c.b16 %v789, %v785
  %v1038 = vpack.c.b16 %v794, %v790
  %v1039 = vpack.c.b16 %v795, %v791
  %v1040 = vpack.c.b16 %v796, %v792
  %v1041 = vpack.c.b16 %v797, %v793
  %v1042 = vpack.c.b16 %v802, %v798
  %v1043 = vpack.c.b16 %v803, %v799
  %v1044 = vpack.c.b16 %v804, %v800
  %v1045 = vpack.c.b16 %v805, %v801
  %v1046 = vpack.c.b16 %v810, %v806
  %v1047 = vpack.c.b16 %v811, %v807
  %v1048 = vpack.c.b16 %v812, %v808
  %v1049 = vpack.c.b16 %v813, %v809
  %v1050 = vpack.c.b16 %v818, %v814
  %v1051 = vpack.c.b16 %v819, %v815
  %v1052 = vpack.c.b16 %v820, %v816
  %v1053 = vpack.c.b16 %v821, %v817
  %v1054 = vpack.c.b16 %v826, %v822
  %v1055 = vpack.c.b16 %v827, %v823
  %v1056 = vpack.c.b16 %v828, %v824
  %v1057 = vpack.c.b16 %v829, %v825
  %v1058 = vpack.c.b16 %v834, %v830
  %v1059 = vpack.c.b16 %v835, %v831
  %v1060 = vpack.c.b16 %v836, %v832
  %v1061 = vpack.c.b16 %v837, %v833
  %v1062 = vpack.c.b16 %v842, %v838
  %v1063 = vpack.c.b16 %v843, %v839
  %v1064 = vpack.c.b16 %v844, %v840
  %v1065 = vpack.c.b16 %v845, %v841
  %v1066 = vpack.c.b16 %v850, %v846
  %v1067 = vpack.c.b16 %v851, %v847
  %v1068 = vpack.c.b16 %v852, %v848
  %v1069 = vpack.c.b16 %v853, %v849
  %v1070 = vpack.c.b16 %v858, %v854
  %v1071 = vpack.c.b16 %v859, %v855
  %v1072 = vpack.c.b16 %v860, %v856
  %v1073 = vpack.c.b16 %v861, %v857
  %v1074 = vpack.c.b16 %v866, %v862
  %v1075 = vpack.c.b16 %v867, %v863
  %v1076 = vpack.c.b16 %v868, %v864
  %v1077 = vpack.c.b16 %v869, %v865
  %v1078 = vpack.c.b16 %v874, %v870
  %v1079 = vpack.c.b16 %v875, %v871
  %v1080 = vpack.c.b16 %v876, %v872
  %v1081 = vpack.c.b16 %v877, %v873
  %v1082 = vpack.c.b16 %v882, %v878
  %v1083 = vpack.c.b16 %v883, %v879
  %v1084 = vpack.c.b16 %v884, %v880
  %v1085 = vpack.c.b16 %v885, %v881
  %v1086 = vpack.c.b16 %v890, %v886
  %v1087 = vpack.c.b16 %v891, %v887
  %v1088 = vpack.c.b16 %v892, %v888
  %v1089 = vpack.c.b16 %v893, %v889
  %vm1286 = vcmask 130048
  %v1288 = vsel %vm1286, %v299, 0
  %1290 = vmatprep.subr.bf16.mxu0 %v895
  %1291 = vmatpush1.bf16.msra.mxu0 %v894
  %1292 = vmatprep.subr.bf16.mxu0 %v899
  %1293 = vmatpush1.bf16.msra.mxu0 %v898
  %1294 = vmatprep.subr.bf16.mxu0 %v903
  %1295 = vmatpush1.bf16.msra.mxu0 %v902
  %1296 = vmatprep.subr.bf16.mxu0 %v907
  %1297 = vmatpush1.bf16.msra.mxu0 %v906
  %1298 = vmatprep.subr.bf16.mxu0 %v911
  %1299 = vmatpush1.bf16.msra.mxu0 %v910
  %1300 = vmatprep.subr.bf16.mxu0 %v915
  %1301 = vmatpush1.bf16.msra.mxu0 %v914
  %1302 = vmatprep.subr.bf16.mxu0 %v919
  %1303 = vmatpush1.bf16.msra.mxu0 %v918
  %1304 = vmatprep.subr.bf16.mxu0 %v923
  %1305 = vmatpush1.bf16.msra.mxu0 %v922
  %1306 = vmatprep.subr.bf16.mxu0 %v927
  %1307 = vmatpush1.bf16.msra.mxu0 %v926
  %1308 = vmatprep.subr.bf16.mxu0 %v931
  %1309 = vmatpush1.bf16.msra.mxu0 %v930
  %1310 = vmatprep.subr.bf16.mxu0 %v935
  %1311 = vmatpush1.bf16.msra.mxu0 %v934
  %1312 = vmatprep.subr.bf16.mxu0 %v939
  %1313 = vmatpush1.bf16.msra.mxu0 %v938
  %1314 = vmatprep.subr.bf16.mxu0 %v943
  %1315 = vmatpush1.bf16.msra.mxu0 %v942
  %1316 = vmatprep.subr.bf16.mxu0 %v947
  %1317 = vmatpush1.bf16.msra.mxu0 %v946
  %1318 = vmatprep.subr.bf16.mxu0 %v951
  %1319 = vmatpush1.bf16.msra.mxu0 %v950
  %1320 = vmatprep.subr.bf16.mxu0 %v955
  %1321 = vmatpush1.bf16.msra.mxu0 %v954
  %1322 = vmatprep.mubr.bf16.mxu0 %v294
  %1323 = vmatmul.mubr.bf16.gmra.mrb[0].mxu0 %v293
  %v1324 = vpop.f32.mrb[0].mxu0
  %v1325 = vadd.f32 %v254, %v1324
  %v1326 = vpop.f32.mrb[0].mxu0
  %v1327 = vadd.f32 %v258, %v1326
  %v1328 = vpop.f32.mrb[0].mxu0
  %v1329 = vadd.f32 %v254, %v1328
  %v1330 = vpop.f32.mrb[0].mxu0
  %v1331 = vadd.f32 %v258, %v1330
  %1332 = vdwg.mxu0
  %1333 = vmatprep.subr.bf16.mxu0 %v959
  %1334 = vmatpush1.bf16.msra.mxu0 %v958
  %1335 = vmatprep.subr.bf16.mxu0 %v963
  %1336 = vmatpush1.bf16.msra.mxu0 %v962
  %1337 = vmatprep.subr.bf16.mxu0 %v967
  %1338 = vmatpush1.bf16.msra.mxu0 %v966
  %1339 = vmatprep.subr.bf16.mxu0 %v971
  %1340 = vmatpush1.bf16.msra.mxu0 %v970
  %1341 = vmatprep.subr.bf16.mxu0 %v975
  %1342 = vmatpush1.bf16.msra.mxu0 %v974
  %1343 = vmatprep.subr.bf16.mxu0 %v979
  %1344 = vmatpush1.bf16.msra.mxu0 %v978
  %1345 = vmatprep.subr.bf16.mxu0 %v983
  %1346 = vmatpush1.bf16.msra.mxu0 %v982
  %1347 = vmatprep.subr.bf16.mxu0 %v987
  %1348 = vmatpush1.bf16.msra.mxu0 %v986
  %1349 = vmatprep.subr.bf16.mxu0 %v991
  %1350 = vmatpush1.bf16.msra.mxu0 %v990
  %1351 = vmatprep.subr.bf16.mxu0 %v995
  %1352 = vmatpush1.bf16.msra.mxu0 %v994
  %1353 = vmatprep.subr.bf16.mxu0 %v999
  %1354 = vmatpush1.bf16.msra.mxu0 %v998
  %1355 = vmatprep.subr.bf16.mxu0 %v1003
  %1356 = vmatpush1.bf16.msra.mxu0 %v1002
  %1357 = vmatprep.subr.bf16.mxu0 %v1007
  %1358 = vmatpush1.bf16.msra.mxu0 %v1006
  %1359 = vmatprep.subr.bf16.mxu0 %v1011
  %1360 = vmatpush1.bf16.msra.mxu0 %v1010
  %1361 = vmatprep.subr.bf16.mxu0 %v1015
  %1362 = vmatpush1.bf16.msra.mxu0 %v1014
  %1363 = vmatprep.subr.bf16.mxu0 %v1019
  %1364 = vmatpush1.bf16.msra.mxu0 %v1018
  %1365 = vmatprep.mubr.bf16.mxu0 %v296
  %1366 = vmatmul.mubr.bf16.gmra.mrb[0].mxu0 %v295
  %v1367 = vpop.f32.mrb[0].mxu0
  %v1368 = vadd.f32 %v1325, %v1367
  %v1369 = vpop.f32.mrb[0].mxu0
  %v1370 = vadd.f32 %v1327, %v1369
  %v1371 = vpop.f32.mrb[0].mxu0
  %v1372 = vadd.f32 %v1329, %v1371
  %v1373 = vpop.f32.mrb[0].mxu0
  %v1374 = vadd.f32 %v1331, %v1373
  %1375 = vdwg.mxu0
  %1376 = vmatprep.subr.bf16.mxu0 %v1023
  %1377 = vmatpush1.bf16.msra.mxu0 %v1022
  %1378 = vmatprep.subr.bf16.mxu0 %v1027
  %1379 = vmatpush1.bf16.msra.mxu0 %v1026
  %1380 = vmatprep.subr.bf16.mxu0 %v1031
  %1381 = vmatpush1.bf16.msra.mxu0 %v1030
  %1382 = vmatprep.subr.bf16.mxu0 %v1035
  %1383 = vmatpush1.bf16.msra.mxu0 %v1034
  %1384 = vmatprep.subr.bf16.mxu0 %v1039
  %1385 = vmatpush1.bf16.msra.mxu0 %v1038
  %1386 = vmatprep.subr.bf16.mxu0 %v1043
  %1387 = vmatpush1.bf16.msra.mxu0 %v1042
  %1388 = vmatprep.subr.bf16.mxu0 %v1047
  %1389 = vmatpush1.bf16.msra.mxu0 %v1046
  %1390 = vmatprep.subr.bf16.mxu0 %v1051
  %1391 = vmatpush1.bf16.msra.mxu0 %v1050
  %1392 = vmatprep.subr.bf16.mxu0 %v1055
  %1393 = vmatpush1.bf16.msra.mxu0 %v1054
  %1394 = vmatprep.subr.bf16.mxu0 %v1059
  %1395 = vmatpush1.bf16.msra.mxu0 %v1058
  %1396 = vmatprep.subr.bf16.mxu0 %v1063
  %1397 = vmatpush1.bf16.msra.mxu0 %v1062
  %1398 = vmatprep.subr.bf16.mxu0 %v1067
  %1399 = vmatpush1.bf16.msra.mxu0 %v1066
  %1400 = vmatprep.subr.bf16.mxu0 %v1071
  %1401 = vmatpush1.bf16.msra.mxu0 %v1070
  %1402 = vmatprep.subr.bf16.mxu0 %v1075
  %1403 = vmatpush1.bf16.msra.mxu0 %v1074
  %1404 = vmatprep.subr.bf16.mxu0 %v1079
  %1405 = vmatpush1.bf16.msra.mxu0 %v1078
  %1406 = vmatprep.subr.bf16.mxu0 %v1083
  %1407 = vmatpush1.bf16.msra.mxu0 %v1082
  %1408 = vmatprep.mubr.bf16.mxu0 %v298
  %1409 = vmatmul.mubr.bf16.gmra.mrb[0].mxu0 %v297
  %v1410 = vpop.f32.mrb[0].mxu0
  %v1411 = vadd.f32 %v1368, %v1410
  %v1412 = vpop.f32.mrb[0].mxu0
  %v1413 = vadd.f32 %v1370, %v1412
  %v1414 = vpop.f32.mrb[0].mxu0
  %v1415 = vadd.f32 %v1372, %v1414
  %v1416 = vpop.f32.mrb[0].mxu0
  %v1417 = vadd.f32 %v1374, %v1416
  %1418 = vdwg.mxu0
  %1419 = vmatprep.subr.bf16.mxu0 %v1087
  %1420 = vmatpush1.bf16.msra.mxu0 %v1086
  %1421 = vmatprep.subr.bf16.mxu0 0
  %1422 = vmatpush1.bf16.msra.mxu0 0
  %1423 = vmatprep.subr.bf16.mxu0 0
  %1424 = vmatpush1.bf16.msra.mxu0 0
  %1425 = vmatprep.subr.bf16.mxu0 0
  %1426 = vmatpush1.bf16.msra.mxu0 0
  %1427 = vmatprep.subr.bf16.mxu0 0
  %1428 = vmatpush1.bf16.msra.mxu0 0
  %1429 = vmatprep.subr.bf16.mxu0 0
  %1430 = vmatpush1.bf16.msra.mxu0 0
  %1431 = vmatprep.subr.bf16.mxu0 0
  %1432 = vmatpush1.bf16.msra.mxu0 0
  %1433 = vmatprep.subr.bf16.mxu0 0
  %1434 = vmatpush1.bf16.msra.mxu0 0
  %1435 = vmatprep.subr.bf16.mxu0 0
  %1436 = vmatpush1.bf16.msra.mxu0 0
  %1437 = vmatprep.subr.bf16.mxu0 0
  %1438 = vmatpush1.bf16.msra.mxu0 0
  %1439 = vmatprep.subr.bf16.mxu0 0
  %1440 = vmatpush1.bf16.msra.mxu0 0
  %1441 = vmatprep.subr.bf16.mxu0 0
  %1442 = vmatpush1.bf16.msra.mxu0 0
  %1443 = vmatprep.subr.bf16.mxu0 0
  %1444 = vmatpush1.bf16.msra.mxu0 0
  %1445 = vmatprep.subr.bf16.mxu0 0
  %1446 = vmatpush1.bf16.msra.mxu0 0
  %1447 = vmatprep.subr.bf16.mxu0 0
  %1448 = vmatpush1.bf16.msra.mxu0 0
  %1449 = vmatprep.subr.bf16.mxu0 0
  %1450 = vmatpush1.bf16.msra.mxu0 0
  %1451 = vmatprep.mubr.bf16.mxu0 0
  %1452 = vmatmul.mubr.bf16.gmra.mrb[0].mxu0 %v1288
  %v1453 = vpop.f32.mrb[0].mxu0
  %v1454 = vadd.f32 %v1411, %v1453
  %v1455 = vpop.f32.mrb[0].mxu0
  %v1456 = vadd.f32 %v1413, %v1455
  %v1457 = vpop.f32.mrb[0].mxu0
  %v1458 = vadd.f32 %v1415, %v1457
  %v1459 = vpop.f32.mrb[0].mxu0
  %v1460 = vadd.f32 %v1417, %v1459
  %1461 = vdwg.mxu0
  %1462 = vmatprep.subr.bf16.mxu0 %v897
  %1463 = vmatpush1.bf16.msra.mxu0 %v896
  %1464 = vmatprep.subr.bf16.mxu0 %v901
  %1465 = vmatpush1.bf16.msra.mxu0 %v900
  %1466 = vmatprep.subr.bf16.mxu0 %v905
  %1467 = vmatpush1.bf16.msra.mxu0 %v904
  %1468 = vmatprep.subr.bf16.mxu0 %v909
  %1469 = vmatpush1.bf16.msra.mxu0 %v908
  %1470 = vmatprep.subr.bf16.mxu0 %v913
  %1471 = vmatpush1.bf16.msra.mxu0 %v912
  %1472 = vmatprep.subr.bf16.mxu0 %v917
  %1473 = vmatpush1.bf16.msra.mxu0 %v916
  %1474 = vmatprep.subr.bf16.mxu0 %v921
  %1475 = vmatpush1.bf16.msra.mxu0 %v920
  %1476 = vmatprep.subr.bf16.mxu0 %v925
  %1477 = vmatpush1.bf16.msra.mxu0 %v924
  %1478 = vmatprep.subr.bf16.mxu0 %v929
  %1479 = vmatpush1.bf16.msra.mxu0 %v928
  %1480 = vmatprep.subr.bf16.mxu0 %v933
  %1481 = vmatpush1.bf16.msra.mxu0 %v932
  %1482 = vmatprep.subr.bf16.mxu0 %v937
  %1483 = vmatpush1.bf16.msra.mxu0 %v936
  %1484 = vmatprep.subr.bf16.mxu0 %v941
  %1485 = vmatpush1.bf16.msra.mxu0 %v940
  %1486 = vmatprep.subr.bf16.mxu0 %v945
  %1487 = vmatpush1.bf16.msra.mxu0 %v944
  %1488 = vmatprep.subr.bf16.mxu0 %v949
  %1489 = vmatpush1.bf16.msra.mxu0 %v948
  %1490 = vmatprep.subr.bf16.mxu0 %v953
  %1491 = vmatpush1.bf16.msra.mxu0 %v952
  %1492 = vmatprep.subr.bf16.mxu0 %v957
  %1493 = vmatpush1.bf16.msra.mxu0 %v956
  %1494 = vmatprep.mubr.bf16.mxu0 %v294
  %1495 = vmatmul.mubr.bf16.gmra.mrb[0].mxu0 %v293
  %v1496 = vpop.f32.mrb[0].mxu0
  %v1497 = vadd.f32 %v262, %v1496
  %v1498 = vpop.f32.mrb[0].mxu0
  %v1499 = vadd.f32 %v266, %v1498
  %v1500 = vpop.f32.mrb[0].mxu0
  %v1501 = vadd.f32 %v262, %v1500
  %v1502 = vpop.f32.mrb[0].mxu0
  %v1503 = vadd.f32 %v266, %v1502
  %1504 = vdwg.mxu0
  %1505 = vmatprep.subr.bf16.mxu0 %v961
  %1506 = vmatpush1.bf16.msra.mxu0 %v960
  %1507 = vmatprep.subr.bf16.mxu0 %v965
  %1508 = vmatpush1.bf16.msra.mxu0 %v964
  %1509 = vmatprep.subr.bf16.mxu0 %v969
  %1510 = vmatpush1.bf16.msra.mxu0 %v968
  %1511 = vmatprep.subr.bf16.mxu0 %v973
  %1512 = vmatpush1.bf16.msra.mxu0 %v972
  %1513 = vmatprep.subr.bf16.mxu0 %v977
  %1514 = vmatpush1.bf16.msra.mxu0 %v976
  %1515 = vmatprep.subr.bf16.mxu0 %v981
  %1516 = vmatpush1.bf16.msra.mxu0 %v980
  %1517 = vmatprep.subr.bf16.mxu0 %v985
  %1518 = vmatpush1.bf16.msra.mxu0 %v984
  %1519 = vmatprep.subr.bf16.mxu0 %v989
  %1520 = vmatpush1.bf16.msra.mxu0 %v988
  %1521 = vmatprep.subr.bf16.mxu0 %v993
  %1522 = vmatpush1.bf16.msra.mxu0 %v992
  %1523 = vmatprep.subr.bf16.mxu0 %v997
  %1524 = vmatpush1.bf16.msra.mxu0 %v996
  %1525 = vmatprep.subr.bf16.mxu0 %v1001
  %1526 = vmatpush1.bf16.msra.mxu0 %v1000
  %1527 = vmatprep.subr.bf16.mxu0 %v1005
  %1528 = vmatpush1.bf16.msra.mxu0 %v1004
  %1529 = vmatprep.subr.bf16.mxu0 %v1009
  %1530 = vmatpush1.bf16.msra.mxu0 %v1008
  %1531 = vmatprep.subr.bf16.mxu0 %v1013
  %1532 = vmatpush1.bf16.msra.mxu0 %v1012
  %1533 = vmatprep.subr.bf16.mxu0 %v1017
  %1534 = vmatpush1.bf16.msra.mxu0 %v1016
  %1535 = vmatprep.subr.bf16.mxu0 %v1021
  %1536 = vmatpush1.bf16.msra.mxu0 %v1020
  %1537 = vmatprep.mubr.bf16.mxu0 %v296
  %1538 = vmatmul.mubr.bf16.gmra.mrb[0].mxu0 %v295
  %v1539 = vpop.f32.mrb[0].mxu0
  %v1540 = vadd.f32 %v1497, %v1539
  %v1541 = vpop.f32.mrb[0].mxu0
  %v1542 = vadd.f32 %v1499, %v1541
  %v1543 = vpop.f32.mrb[0].mxu0
  %v1544 = vadd.f32 %v1501, %v1543
  %v1545 = vpop.f32.mrb[0].mxu0
  %v1546 = vadd.f32 %v1503, %v1545
  %1547 = vdwg.mxu0
  %1548 = vmatprep.subr.bf16.mxu0 %v1025
  %1549 = vmatpush1.bf16.msra.mxu0 %v1024
  %1550 = vmatprep.subr.bf16.mxu0 %v1029
  %1551 = vmatpush1.bf16.msra.mxu0 %v1028
  %1552 = vmatprep.subr.bf16.mxu0 %v1033
  %1553 = vmatpush1.bf16.msra.mxu0 %v1032
  %1554 = vmatprep.subr.bf16.mxu0 %v1037
  %1555 = vmatpush1.bf16.msra.mxu0 %v1036
  %1556 = vmatprep.subr.bf16.mxu0 %v1041
  %1557 = vmatpush1.bf16.msra.mxu0 %v1040
  %1558 = vmatprep.subr.bf16.mxu0 %v1045
  %1559 = vmatpush1.bf16.msra.mxu0 %v1044
  %1560 = vmatprep.subr.bf16.mxu0 %v1049
  %1561 = vmatpush1.bf16.msra.mxu0 %v1048
  %1562 = vmatprep.subr.bf16.mxu0 %v1053
  %1563 = vmatpush1.bf16.msra.mxu0 %v1052
  %1564 = vmatprep.subr.bf16.mxu0 %v1057
  %1565 = vmatpush1.bf16.msra.mxu0 %v1056
  %1566 = vmatprep.subr.bf16.mxu0 %v1061
  %1567 = vmatpush1.bf16.msra.mxu0 %v1060
  %1568 = vmatprep.subr.bf16.mxu0 %v1065
  %1569 = vmatpush1.bf16.msra.mxu0 %v1064
  %1570 = vmatprep.subr.bf16.mxu0 %v1069
  %1571 = vmatpush1.bf16.msra.mxu0 %v1068
  %1572 = vmatprep.subr.bf16.mxu0 %v1073
  %1573 = vmatpush1.bf16.msra.mxu0 %v1072
  %1574 = vmatprep.subr.bf16.mxu0 %v1077
  %1575 = vmatpush1.bf16.msra.mxu0 %v1076
  %1576 = vmatprep.subr.bf16.mxu0 %v1081
  %1577 = vmatpush1.bf16.msra.mxu0 %v1080
  %1578 = vmatprep.subr.bf16.mxu0 %v1085
  %1579 = vmatpush1.bf16.msra.mxu0 %v1084
  %1580 = vmatprep.mubr.bf16.mxu0 %v298
  %1581 = vmatmul.mubr.bf16.gmra.mrb[0].mxu0 %v297
  %v1582 = vpop.f32.mrb[0].mxu0
  %v1583 = vadd.f32 %v1540, %v1582
  %v1584 = vpop.f32.mrb[0].mxu0
  %v1585 = vadd.f32 %v1542, %v1584
  %v1586 = vpop.f32.mrb[0].mxu0
  %v1587 = vadd.f32 %v1544, %v1586
  %v1588 = vpop.f32.mrb[0].mxu0
  %v1589 = vadd.f32 %v1546, %v1588
  %1590 = vdwg.mxu0
  %1591 = vmatprep.subr.bf16.mxu0 %v1089
  %1592 = vmatpush1.bf16.msra.mxu0 %v1088
  %1593 = vmatprep.subr.bf16.mxu0 0
  %1594 = vmatpush1.bf16.msra.mxu0 0
  %1595 = vmatprep.subr.bf16.mxu0 0
  %1596 = vmatpush1.bf16.msra.mxu0 0
  %1597 = vmatprep.subr.bf16.mxu0 0
  %1598 = vmatpush1.bf16.msra.mxu0 0
  %1599 = vmatprep.subr.bf16.mxu0 0
  %1600 = vmatpush1.bf16.msra.mxu0 0
  %1601 = vmatprep.subr.bf16.mxu0 0
  %1602 = vmatpush1.bf16.msra.mxu0 0
  %1603 = vmatprep.subr.bf16.mxu0 0
  %1604 = vmatpush1.bf16.msra.mxu0 0
  %1605 = vmatprep.subr.bf16.mxu0 0
  %1606 = vmatpush1.bf16.msra.mxu0 0
  %1607 = vmatprep.subr.bf16.mxu0 0
  %1608 = vmatpush1.bf16.msra.mxu0 0
  %1609 = vmatprep.subr.bf16.mxu0 0
  %1610 = vmatpush1.bf16.msra.mxu0 0
  %1611 = vmatprep.subr.bf16.mxu0 0
  %1612 = vmatpush1.bf16.msra.mxu0 0
  %1613 = vmatprep.subr.bf16.mxu0 0
  %1614 = vmatpush1.bf16.msra.mxu0 0
  %1615 = vmatprep.subr.bf16.mxu0 0
  %1616 = vmatpush1.bf16.msra.mxu0 0
  %1617 = vmatprep.subr.bf16.mxu0 0
  %1618 = vmatpush1.bf16.msra.mxu0 0
  %1619 = vmatprep.subr.bf16.mxu0 0
  %1620 = vmatpush1.bf16.msra.mxu0 0
  %1621 = vmatprep.subr.bf16.mxu0 0
  %1622 = vmatpush1.bf16.msra.mxu0 0
  %1623 = vmatprep.mubr.bf16.mxu0 0
  %1624 = vmatmul.mubr.bf16.gmra.mrb[0].mxu0 %v1288
  %v1625 = vpop.f32.mrb[0].mxu0
  %v1626 = vadd.f32 %v1583, %v1625
  %v1627 = vpop.f32.mrb[0].mxu0
  %v1628 = vadd.f32 %v1585, %v1627
  %v1629 = vpop.f32.mrb[0].mxu0
  %v1630 = vadd.f32 %v1587, %v1629
  %v1631 = vpop.f32.mrb[0].mxu0
  %v1632 = vadd.f32 %v1589, %v1631
  %1633 = vdwg.mxu0
  %v1634 = vmax.f32 %v1454, 0.0
  %v1635 = vmax.f32 %v1456, 0.0
  %v1636 = vmax.f32 %v1626, 0.0
  %v1637 = vmax.f32 %v1628, 0.0
  %v1638 = vmax.f32 %v1458, 0.0
  %v1639 = vmax.f32 %v1460, 0.0
  %v1640 = vmax.f32 %v1630, 0.0
  %v1641 = vmax.f32 %v1632, 0.0
  %v1642 = vpack.c.bf16 %v1638, %v1634
  %v1643 = vpack.c.bf16 %v1639, %v1635
  %v1644 = vpack.c.bf16 %v1640, %v1636
  %v1645 = vpack.c.bf16 %v1641, %v1637
  %v1646 = vld [vmem:[%s3] sm:$0xff]
  %v1647 = vld [vmem:[%s3 + $0x8] sm:$0xff]
  %v1648 = vld [vmem:[%s3 + $0x10] sm:$0xff]
  %v1649 = vld [vmem:[%s3 + $0x18] sm:$0xff]
  %v1650 = vld [vmem:[%s3 + $0x20] sm:$0xff]
  %v1651 = vld [vmem:[%s3 + $0x28] sm:$0xff]
  %v1652 = vld [vmem:[%s3 + $0x30] sm:$0xff]
  %v1653 = vld [vmem:[%s3 + $0x38] sm:$0xff]
  %v1654 = vld [vmem:[%s3 + $0x40] sm:$0xff]
  %v1655 = vld [vmem:[%s3 + $0x48] sm:$0xff]
  %v1656 = vld [vmem:[%s3 + $0x50] sm:$0xff]
  %v1657 = vld [vmem:[%s3 + $0x58] sm:$0xff]
  %v1658 = vld [vmem:[%s3 + $0x60] sm:$0xff]
  %v1659 = vld [vmem:[%s3 + $0x68] sm:$0xff]
  %v1660 = vld [vmem:[%s3 + $0x70] sm:$0xff]
  %v1661 = vld [vmem:[%s3 + $0x78] sm:$0xff]
  %v1662 = vld [vmem:[%s3 + $0x80] sm:$0xff]
  %v1663 = vld [vmem:[%s3 + $0x88] sm:$0xff]
  %v1664 = vld [vmem:[%s3 + $0x90] sm:$0xff]
  %v1665 = vld [vmem:[%s3 + $0x98] sm:$0xff]
  %v1666 = vld [vmem:[%s3 + $0xa0] sm:$0xff]
  %v1667 = vld [vmem:[%s3 + $0xa8] sm:$0xff]
  %v1668 = vld [vmem:[%s3 + $0xb0] sm:$0xff]
  %v1669 = vld [vmem:[%s3 + $0xb8] sm:$0xff]
  %v1670 = vld [vmem:[%s3 + $0xc0] sm:$0xff]
  %v1671 = vld [vmem:[%s3 + $0xc8] sm:$0xff]
  %v1672 = vld [vmem:[%s3 + $0xd0] sm:$0xff]
  %v1673 = vld [vmem:[%s3 + $0xd8] sm:$0xff]
  %v1674 = vld [vmem:[%s3 + $0xe0] sm:$0xff]
  %v1675 = vld [vmem:[%s3 + $0xe8] sm:$0xff]
  %v1676 = vld [vmem:[%s3 + $0xf0] sm:$0xff]
  %v1677 = vld [vmem:[%s3 + $0xf8] sm:$0xff]
  %v1678 = vld [vmem:[%s3 + $0x100] sm:$0xff]
  %v1679 = vld [vmem:[%s3 + $0x108] sm:$0xff]
  %v1680 = vld [vmem:[%s3 + $0x110] sm:$0xff]
  %v1681 = vld [vmem:[%s3 + $0x118] sm:$0xff]
  %v1682 = vld [vmem:[%s3 + $0x120] sm:$0xff]
  %v1683 = vld [vmem:[%s3 + $0x128] sm:$0xff]
  %v1684 = vld [vmem:[%s3 + $0x130] sm:$0xff]
  %v1685 = vld [vmem:[%s3 + $0x138] sm:$0xff]
  %v1686 = vld [vmem:[%s3 + $0x140] sm:$0xff]
  %v1687 = vld [vmem:[%s3 + $0x148] sm:$0xff]
  %v1688 = vld [vmem:[%s3 + $0x150] sm:$0xff]
  %v1689 = vld [vmem:[%s3 + $0x158] sm:$0xff]
  %v1690 = vld [vmem:[%s3 + $0x160] sm:$0xff]
  %v1691 = vld [vmem:[%s3 + $0x168] sm:$0xff]
  %v1692 = vld [vmem:[%s3 + $0x170] sm:$0xff]
  %v1693 = vld [vmem:[%s3 + $0x178] sm:$0xff]
  %v1694 = vld [vmem:[%s3 + $0x180] sm:$0xff]
  %v1695 = vld [vmem:[%s3 + $0x188] sm:$0xff]
  %v1696 = vld [vmem:[%s3 + $0x190] sm:$0xff]
  %v1697 = vld [vmem:[%s3 + $0x198] sm:$0xff]
  %v1698 = vld [vmem:[%s3 + $0x1a0] sm:$0xff]
  %v1699 = vld [vmem:[%s3 + $0x1a8] sm:$0xff]
  %v1700 = vld [vmem:[%s3 + $0x1b0] sm:$0xff]
  %v1701 = vld [vmem:[%s3 + $0x1b8] sm:$0xff]
  %v1702 = vld [vmem:[%s3 + $0x1c0] sm:$0xff]
  %v1703 = vld [vmem:[%s3 + $0x1c8] sm:$0xff]
  %v1704 = vld [vmem:[%s3 + $0x1d0] sm:$0xff]
  %v1705 = vld [vmem:[%s3 + $0x1d8] sm:$0xff]
  %v1706 = vld [vmem:[%s3 + $0x1e0] sm:$0xff]
  %v1707 = vld [vmem:[%s3 + $0x1e8] sm:$0xff]
  %v1708 = vld [vmem:[%s3 + $0x1f0] sm:$0xff]
  %v1709 = vld [vmem:[%s3 + $0x1f8] sm:$0xff]
  %v1710 = vld [vmem:[%s4] sm:$0x3]
  %v1712 = vlaneseq
  %v1713 = vshrl.u32 %v1712, 7
  %v1714 = vsub.s32 0, %v1713
  %v1715 = vrot.slane %v1710, %v1714
  %v1716 = vlaneseq
  %v1717 = vshrl.u32 %v1716, 7
  %v1718 = vsub.s32 1, %v1717
  %v1719 = vrot.slane %v1710, %v1718
  %v1786 = vunpack.c.l.b16 %v1646
  %v1787 = vunpack.c.h.b16 %v1646
  %v1788 = vunpack.c.l.b16 %v1647
  %v1789 = vunpack.c.h.b16 %v1647
  %v1790 = vunpack.c.l.b16 %v1648
  %v1791 = vunpack.c.h.b16 %v1648
  %v1792 = vunpack.c.l.b16 %v1649
  %v1793 = vunpack.c.h.b16 %v1649
  %v1794 = vunpack.c.l.b16 %v1650
  %v1795 = vunpack.c.h.b16 %v1650
  %v1796 = vunpack.c.l.b16 %v1651
  %v1797 = vunpack.c.h.b16 %v1651
  %v1798 = vunpack.c.l.b16 %v1652
  %v1799 = vunpack.c.h.b16 %v1652
  %v1800 = vunpack.c.l.b16 %v1653
  %v1801 = vunpack.c.h.b16 %v1653
  %v1802 = vunpack.c.l.b16 %v1654
  %v1803 = vunpack.c.h.b16 %v1654
  %v1804 = vunpack.c.l.b16 %v1655
  %v1805 = vunpack.c.h.b16 %v1655
  %v1806 = vunpack.c.l.b16 %v1656
  %v1807 = vunpack.c.h.b16 %v1656
  %v1808 = vunpack.c.l.b16 %v1657
  %v1809 = vunpack.c.h.b16 %v1657
  %v1810 = vunpack.c.l.b16 %v1658
  %v1811 = vunpack.c.h.b16 %v1658
  %v1812 = vunpack.c.l.b16 %v1659
  %v1813 = vunpack.c.h.b16 %v1659
  %v1814 = vunpack.c.l.b16 %v1660
  %v1815 = vunpack.c.h.b16 %v1660
  %v1816 = vunpack.c.l.b16 %v1661
  %v1817 = vunpack.c.h.b16 %v1661
  %v1818 = vunpack.c.l.b16 %v1662
  %v1819 = vunpack.c.h.b16 %v1662
  %v1820 = vunpack.c.l.b16 %v1663
  %v1821 = vunpack.c.h.b16 %v1663
  %v1822 = vunpack.c.l.b16 %v1664
  %v1823 = vunpack.c.h.b16 %v1664
  %v1824 = vunpack.c.l.b16 %v1665
  %v1825 = vunpack.c.h.b16 %v1665
  %v1826 = vunpack.c.l.b16 %v1666
  %v1827 = vunpack.c.h.b16 %v1666
  %v1828 = vunpack.c.l.b16 %v1667
  %v1829 = vunpack.c.h.b16 %v1667
  %v1830 = vunpack.c.l.b16 %v1668
  %v1831 = vunpack.c.h.b16 %v1668
  %v1832 = vunpack.c.l.b16 %v1669
  %v1833 = vunpack.c.h.b16 %v1669
  %v1834 = vunpack.c.l.b16 %v1670
  %v1835 = vunpack.c.h.b16 %v1670
  %v1836 = vunpack.c.l.b16 %v1671
  %v1837 = vunpack.c.h.b16 %v1671
  %v1838 = vunpack.c.l.b16 %v1672
  %v1839 = vunpack.c.h.b16 %v1672
  %v1840 = vunpack.c.l.b16 %v1673
  %v1841 = vunpack.c.h.b16 %v1673
  %v1842 = vunpack.c.l.b16 %v1674
  %v1843 = vunpack.c.h.b16 %v1674
  %v1844 = vunpack.c.l.b16 %v1675
  %v1845 = vunpack.c.h.b16 %v1675
  %v1846 = vunpack.c.l.b16 %v1676
  %v1847 = vunpack.c.h.b16 %v1676
  %v1848 = vunpack.c.l.b16 %v1677
  %v1849 = vunpack.c.h.b16 %v1677
  %v1850 = vunpack.c.l.b16 %v1678
  %v1851 = vunpack.c.h.b16 %v1678
  %v1852 = vunpack.c.l.b16 %v1679
  %v1853 = vunpack.c.h.b16 %v1679
  %v1854 = vunpack.c.l.b16 %v1680
  %v1855 = vunpack.c.h.b16 %v1680
  %v1856 = vunpack.c.l.b16 %v1681
  %v1857 = vunpack.c.h.b16 %v1681
  %v1858 = vunpack.c.l.b16 %v1682
  %v1859 = vunpack.c.h.b16 %v1682
  %v1860 = vunpack.c.l.b16 %v1683
  %v1861 = vunpack.c.h.b16 %v1683
  %v1862 = vunpack.c.l.b16 %v1684
  %v1863 = vunpack.c.h.b16 %v1684
  %v1864 = vunpack.c.l.b16 %v1685
  %v1865 = vunpack.c.h.b16 %v1685
  %v1866 = vunpack.c.l.b16 %v1686
  %v1867 = vunpack.c.h.b16 %v1686
  %v1868 = vunpack.c.l.b16 %v1687
  %v1869 = vunpack.c.h.b16 %v1687
  %v1870 = vunpack.c.l.b16 %v1688
  %v1871 = vunpack.c.h.b16 %v1688
  %v1872 = vunpack.c.l.b16 %v1689
  %v1873 = vunpack.c.h.b16 %v1689
  %v1874 = vunpack.c.l.b16 %v1690
  %v1875 = vunpack.c.h.b16 %v1690
  %v1876 = vunpack.c.l.b16 %v1691
  %v1877 = vunpack.c.h.b16 %v1691
  %v1878 = vunpack.c.l.b16 %v1692
  %v1879 = vunpack.c.h.b16 %v1692
  %v1880 = vunpack.c.l.b16 %v1693
  %v1881 = vunpack.c.h.b16 %v1693
  %v1882 = vunpack.c.l.b16 %v1694
  %v1883 = vunpack.c.h.b16 %v1694
  %v1884 = vunpack.c.l.b16 %v1695
  %v1885 = vunpack.c.h.b16 %v1695
  %v1886 = vunpack.c.l.b16 %v1696
  %v1887 = vunpack.c.h.b16 %v1696
  %v1888 = vunpack.c.l.b16 %v1697
  %v1889 = vunpack.c.h.b16 %v1697
  %v1890 = vunpack.c.l.b16 %v1698
  %v1891 = vunpack.c.h.b16 %v1698
  %v1892 = vunpack.c.l.b16 %v1699
  %v1893 = vunpack.c.h.b16 %v1699
  %v1894 = vunpack.c.l.b16 %v1700
  %v1895 = vunpack.c.h.b16 %v1700
  %v1896 = vunpack.c.l.b16 %v1701
  %v1897 = vunpack.c.h.b16 %v1701
  %v1898 = vunpack.c.l.b16 %v1702
  %v1899 = vunpack.c.h.b16 %v1702
  %v1900 = vunpack.c.l.b16 %v1703
  %v1901 = vunpack.c.h.b16 %v1703
  %v1902 = vunpack.c.l.b16 %v1704
  %v1903 = vunpack.c.h.b16 %v1704
  %v1904 = vunpack.c.l.b16 %v1705
  %v1905 = vunpack.c.h.b16 %v1705
  %v1906 = vunpack.c.l.b16 %v1706
  %v1907 = vunpack.c.h.b16 %v1706
  %v1908 = vunpack.c.l.b16 %v1707
  %v1909 = vunpack.c.h.b16 %v1707
  %v1910 = vunpack.c.l.b16 %v1708
  %v1911 = vunpack.c.h.b16 %v1708
  %v1912 = vunpack.c.l.b16 %v1709
  %v1913 = vunpack.c.h.b16 %v1709
  %v1914 = vpack.c.b16 %v1788, %v1786
  %v1915 = vpack.c.b16 %v1789, %v1787
  %v1916 = vpack.c.b16 %v1792, %v1790
  %v1917 = vpack.c.b16 %v1793, %v1791
  %v1918 = vpack.c.b16 %v1796, %v1794
  %v1919 = vpack.c.b16 %v1797, %v1795
  %v1920 = vpack.c.b16 %v1800, %v1798
  %v1921 = vpack.c.b16 %v1801, %v1799
  %v1922 = vpack.c.b16 %v1804, %v1802
  %v1923 = vpack.c.b16 %v1805, %v1803
  %v1924 = vpack.c.b16 %v1808, %v1806
  %v1925 = vpack.c.b16 %v1809, %v1807
  %v1926 = vpack.c.b16 %v1812, %v1810
  %v1927 = vpack.c.b16 %v1813, %v1811
  %v1928 = vpack.c.b16 %v1816, %v1814
  %v1929 = vpack.c.b16 %v1817, %v1815
  %v1930 = vpack.c.b16 %v1820, %v1818
  %v1931 = vpack.c.b16 %v1821, %v1819
  %v1932 = vpack.c.b16 %v1824, %v1822
  %v1933 = vpack.c.b16 %v1825, %v1823
  %v1934 = vpack.c.b16 %v1828, %v1826
  %v1935 = vpack.c.b16 %v1829, %v1827
  %v1936 = vpack.c.b16 %v1832, %v1830
  %v1937 = vpack.c.b16 %v1833, %v1831
  %v1938 = vpack.c.b16 %v1836, %v1834
  %v1939 = vpack.c.b16 %v1837, %v1835
  %v1940 = vpack.c.b16 %v1840, %v1838
  %v1941 = vpack.c.b16 %v1841, %v1839
  %v1942 = vpack.c.b16 %v1844, %v1842
  %v1943 = vpack.c.b16 %v1845, %v1843
  %v1944 = vpack.c.b16 %v1848, %v1846
  %v1945 = vpack.c.b16 %v1849, %v1847
  %v1946 = vpack.c.b16 %v1852, %v1850
  %v1947 = vpack.c.b16 %v1853, %v1851
  %v1948 = vpack.c.b16 %v1856, %v1854
  %v1949 = vpack.c.b16 %v1857, %v1855
  %v1950 = vpack.c.b16 %v1860, %v1858
  %v1951 = vpack.c.b16 %v1861, %v1859
  %v1952 = vpack.c.b16 %v1864, %v1862
  %v1953 = vpack.c.b16 %v1865, %v1863
  %v1954 = vpack.c.b16 %v1868, %v1866
  %v1955 = vpack.c.b16 %v1869, %v1867
  %v1956 = vpack.c.b16 %v1872, %v1870
  %v1957 = vpack.c.b16 %v1873, %v1871
  %v1958 = vpack.c.b16 %v1876, %v1874
  %v1959 = vpack.c.b16 %v1877, %v1875
  %v1960 = vpack.c.b16 %v1880, %v1878
  %v1961 = vpack.c.b16 %v1881, %v1879
  %v1962 = vpack.c.b16 %v1884, %v1882
  %v1963 = vpack.c.b16 %v1885, %v1883
  %v1964 = vpack.c.b16 %v1888, %v1886
  %v1965 = vpack.c.b16 %v1889, %v1887
  %v1966 = vpack.c.b16 %v1892, %v1890
  %v1967 = vpack.c.b16 %v1893, %v1891
  %v1968 = vpack.c.b16 %v1896, %v1894
  %v1969 = vpack.c.b16 %v1897, %v1895
  %v1970 = vpack.c.b16 %v1900, %v1898
  %v1971 = vpack.c.b16 %v1901, %v1899
  %v1972 = vpack.c.b16 %v1904, %v1902
  %v1973 = vpack.c.b16 %v1905, %v1903
  %v1974 = vpack.c.b16 %v1908, %v1906
  %v1975 = vpack.c.b16 %v1909, %v1907
  %v1976 = vpack.c.b16 %v1912, %v1910
  %v1977 = vpack.c.b16 %v1913, %v1911
  %2042 = vmatprep.subr.bf16.mxu0 %v1915
  %2043 = vmatpush1.bf16.msra.mxu0 %v1914
  %2044 = vmatprep.subr.bf16.mxu0 %v1917
  %2045 = vmatpush1.bf16.msra.mxu0 %v1916
  %2046 = vmatprep.subr.bf16.mxu0 %v1919
  %2047 = vmatpush1.bf16.msra.mxu0 %v1918
  %2048 = vmatprep.subr.bf16.mxu0 %v1921
  %2049 = vmatpush1.bf16.msra.mxu0 %v1920
  %2050 = vmatprep.subr.bf16.mxu0 %v1923
  %2051 = vmatpush1.bf16.msra.mxu0 %v1922
  %2052 = vmatprep.subr.bf16.mxu0 %v1925
  %2053 = vmatpush1.bf16.msra.mxu0 %v1924
  %2054 = vmatprep.subr.bf16.mxu0 %v1927
  %2055 = vmatpush1.bf16.msra.mxu0 %v1926
  %2056 = vmatprep.subr.bf16.mxu0 %v1929
  %2057 = vmatpush1.bf16.msra.mxu0 %v1928
  %2058 = vmatprep.subr.bf16.mxu0 %v1931
  %2059 = vmatpush1.bf16.msra.mxu0 %v1930
  %2060 = vmatprep.subr.bf16.mxu0 %v1933
  %2061 = vmatpush1.bf16.msra.mxu0 %v1932
  %2062 = vmatprep.subr.bf16.mxu0 %v1935
  %2063 = vmatpush1.bf16.msra.mxu0 %v1934
  %2064 = vmatprep.subr.bf16.mxu0 %v1937
  %2065 = vmatpush1.bf16.msra.mxu0 %v1936
  %2066 = vmatprep.subr.bf16.mxu0 %v1939
  %2067 = vmatpush1.bf16.msra.mxu0 %v1938
  %2068 = vmatprep.subr.bf16.mxu0 %v1941
  %2069 = vmatpush1.bf16.msra.mxu0 %v1940
  %2070 = vmatprep.subr.bf16.mxu0 %v1943
  %2071 = vmatpush1.bf16.msra.mxu0 %v1942
  %2072 = vmatprep.subr.bf16.mxu0 %v1945
  %2073 = vmatpush1.bf16.msra.mxu0 %v1944
  %2074 = vmatprep.mubr.bf16.mxu0 %v1643
  %2075 = vmatmul.mubr.bf16.gmra.mrb[0].mxu0 %v1642
  %v2076 = vpop.f32.mrb[0].mxu0
  %v2077 = vadd.f32 %v1715, %v2076
  %v2078 = vpop.f32.mrb[0].mxu0
  %v2079 = vadd.f32 %v1719, %v2078
  %v2080 = vpop.f32.mrb[0].mxu0
  %v2081 = vadd.f32 %v1715, %v2080
  %v2082 = vpop.f32.mrb[0].mxu0
  %v2083 = vadd.f32 %v1719, %v2082
  %2084 = vdwg.mxu0
  %2085 = vmatprep.subr.bf16.mxu0 %v1947
  %2086 = vmatpush1.bf16.msra.mxu0 %v1946
  %2087 = vmatprep.subr.bf16.mxu0 %v1949
  %2088 = vmatpush1.bf16.msra.mxu0 %v1948
  %2089 = vmatprep.subr.bf16.mxu0 %v1951
  %2090 = vmatpush1.bf16.msra.mxu0 %v1950
  %2091 = vmatprep.subr.bf16.mxu0 %v1953
  %2092 = vmatpush1.bf16.msra.mxu0 %v1952
  %2093 = vmatprep.subr.bf16.mxu0 %v1955
  %2094 = vmatpush1.bf16.msra.mxu0 %v1954
  %2095 = vmatprep.subr.bf16.mxu0 %v1957
  %2096 = vmatpush1.bf16.msra.mxu0 %v1956
  %2097 = vmatprep.subr.bf16.mxu0 %v1959
  %2098 = vmatpush1.bf16.msra.mxu0 %v1958
  %2099 = vmatprep.subr.bf16.mxu0 %v1961
  %2100 = vmatpush1.bf16.msra.mxu0 %v1960
  %2101 = vmatprep.subr.bf16.mxu0 %v1963
  %2102 = vmatpush1.bf16.msra.mxu0 %v1962
  %2103 = vmatprep.subr.bf16.mxu0 %v1965
  %2104 = vmatpush1.bf16.msra.mxu0 %v1964
  %2105 = vmatprep.subr.bf16.mxu0 %v1967
  %2106 = vmatpush1.bf16.msra.mxu0 %v1966
  %2107 = vmatprep.subr.bf16.mxu0 %v1969
  %2108 = vmatpush1.bf16.msra.mxu0 %v1968
  %2109 = vmatprep.subr.bf16.mxu0 %v1971
  %2110 = vmatpush1.bf16.msra.mxu0 %v1970
  %2111 = vmatprep.subr.bf16.mxu0 %v1973
  %2112 = vmatpush1.bf16.msra.mxu0 %v1972
  %2113 = vmatprep.subr.bf16.mxu0 %v1975
  %2114 = vmatpush1.bf16.msra.mxu0 %v1974
  %2115 = vmatprep.subr.bf16.mxu0 %v1977
  %2116 = vmatpush1.bf16.msra.mxu0 %v1976
  %2117 = vmatprep.mubr.bf16.mxu0 %v1645
  %2118 = vmatmul.mubr.bf16.gmra.mrb[0].mxu0 %v1644
  %v2119 = vpop.f32.mrb[0].mxu0
  %v2120 = vadd.f32 %v2077, %v2119
  %v2121 = vpop.f32.mrb[0].mxu0
  %v2122 = vadd.f32 %v2079, %v2121
  %v2123 = vpop.f32.mrb[0].mxu0
  %v2124 = vadd.f32 %v2081, %v2123
  %v2125 = vpop.f32.mrb[0].mxu0
  %v2126 = vadd.f32 %v2083, %v2125
  %2127 = vdwg.mxu0
  %v2128 = vmax.f32 %v2120, 0.0
  %v2129 = vmax.f32 %v2122, 0.0
  %v2130 = vmax.f32 %v2124, 0.0
  %v2131 = vmax.f32 %v2126, 0.0
  %v2132 = vpack.c.bf16 %v2130, %v2128
  %v2133 = vpack.c.bf16 %v2131, %v2129
  %v2134 = vld [vmem:[%s5] sm:$0xf]
  %v2135 = vld [vmem:[%s5 + $0x4] sm:$0xf]
  %v2136 = vld [vmem:[%s5 + $0x8] sm:$0xf]
  %v2137 = vld [vmem:[%s5 + $0xc] sm:$0xf]
  %v2138 = vld [vmem:[%s5 + $0x10] sm:$0xf]
  %v2139 = vld [vmem:[%s5 + $0x14] sm:$0xf]
  %v2140 = vld [vmem:[%s5 + $0x18] sm:$0xf]
  %v2141 = vld [vmem:[%s5 + $0x1c] sm:$0xf]
  %v2142 = vld [vmem:[%s5 + $0x20] sm:$0xf]
  %v2143 = vld [vmem:[%s5 + $0x24] sm:$0xf]
  %v2144 = vld [vmem:[%s5 + $0x28] sm:$0xf]
  %v2145 = vld [vmem:[%s5 + $0x2c] sm:$0xf]
  %v2146 = vld [vmem:[%s5 + $0x30] sm:$0xf]
  %v2147 = vld [vmem:[%s5 + $0x34] sm:$0xf]
  %v2148 = vld [vmem:[%s5 + $0x38] sm:$0xf]
  %v2149 = vld [vmem:[%s5 + $0x3c] sm:$0xf]
  %v2150 = vld [vmem:[%s5 + $0x40] sm:$0xf]
  %v2151 = vld [vmem:[%s5 + $0x44] sm:$0xf]
  %v2152 = vld [vmem:[%s5 + $0x48] sm:$0xf]
  %v2153 = vld [vmem:[%s5 + $0x4c] sm:$0xf]
  %v2154 = vld [vmem:[%s5 + $0x50] sm:$0xf]
  %v2155 = vld [vmem:[%s5 + $0x54] sm:$0xf]
  %v2156 = vld [vmem:[%s5 + $0x58] sm:$0xf]
  %v2157 = vld [vmem:[%s5 + $0x5c] sm:$0xf]
  %v2158 = vld [vmem:[%s5 + $0x60] sm:$0xf]
  %v2159 = vld [vmem:[%s5 + $0x64] sm:$0xf]
  %v2160 = vld [vmem:[%s5 + $0x68] sm:$0xf]
  %v2161 = vld [vmem:[%s5 + $0x6c] sm:$0xf]
  %v2162 = vld [vmem:[%s5 + $0x70] sm:$0xf]
  %v2163 = vld [vmem:[%s5 + $0x74] sm:$0xf]
  %v2164 = vld [vmem:[%s5 + $0x78] sm:$0xf]
  %v2165 = vld [vmem:[%s5 + $0x7c] sm:$0xf]
  %v2166 = vld [vmem:[%s6] sm:$0x1]
  %v2168 = vlaneseq
  %v2169 = vshrl.u32 %v2168, 7
  %v2170 = vsub.s32 0, %v2169
  %v2171 = vrot.slane %v2166, %v2170
  %v2205 = vunpack.c.l.b16 %v2134
  %v2206 = vunpack.c.l.b16 %v2135
  %v2207 = vunpack.c.l.b16 %v2136
  %v2208 = vunpack.c.l.b16 %v2137
  %v2209 = vunpack.c.l.b16 %v2138
  %v2210 = vunpack.c.l.b16 %v2139
  %v2211 = vunpack.c.l.b16 %v2140
  %v2212 = vunpack.c.l.b16 %v2141
  %v2213 = vunpack.c.l.b16 %v2142
  %v2214 = vunpack.c.l.b16 %v2143
  %v2215 = vunpack.c.l.b16 %v2144
  %v2216 = vunpack.c.l.b16 %v2145
  %v2217 = vunpack.c.l.b16 %v2146
  %v2218 = vunpack.c.l.b16 %v2147
  %v2219 = vunpack.c.l.b16 %v2148
  %v2220 = vunpack.c.l.b16 %v2149
  %v2221 = vunpack.c.l.b16 %v2150
  %v2222 = vunpack.c.l.b16 %v2151
  %v2223 = vunpack.c.l.b16 %v2152
  %v2224 = vunpack.c.l.b16 %v2153
  %v2225 = vunpack.c.l.b16 %v2154
  %v2226 = vunpack.c.l.b16 %v2155
  %v2227 = vunpack.c.l.b16 %v2156
  %v2228 = vunpack.c.l.b16 %v2157
  %v2229 = vunpack.c.l.b16 %v2158
  %v2230 = vunpack.c.l.b16 %v2159
  %v2231 = vunpack.c.l.b16 %v2160
  %v2232 = vunpack.c.l.b16 %v2161
  %v2233 = vunpack.c.l.b16 %v2162
  %v2234 = vunpack.c.l.b16 %v2163
  %v2235 = vunpack.c.l.b16 %v2164
  %v2236 = vunpack.c.l.b16 %v2165
  %v2237 = vpack.c.b16 %v2206, %v2205
  %v2238 = vpack.c.b16 %v2208, %v2207
  %v2239 = vpack.c.b16 %v2210, %v2209
  %v2240 = vpack.c.b16 %v2212, %v2211
  %v2241 = vpack.c.b16 %v2214, %v2213
  %v2242 = vpack.c.b16 %v2216, %v2215
  %v2243 = vpack.c.b16 %v2218, %v2217
  %v2244 = vpack.c.b16 %v2220, %v2219
  %v2245 = vpack.c.b16 %v2222, %v2221
  %v2246 = vpack.c.b16 %v2224, %v2223
  %v2247 = vpack.c.b16 %v2226, %v2225
  %v2248 = vpack.c.b16 %v2228, %v2227
  %v2249 = vpack.c.b16 %v2230, %v2229
  %v2250 = vpack.c.b16 %v2232, %v2231
  %v2251 = vpack.c.b16 %v2234, %v2233
  %v2252 = vpack.c.b16 %v2236, %v2235
  %2269 = vmatprep.subr.bf16.mxu0 0
  %2270 = vmatpush1.bf16.msra.mxu0 %v2237
  %2271 = vmatprep.subr.bf16.mxu0 0
  %2272 = vmatpush1.bf16.msra.mxu0 %v2238
  %2273 = vmatprep.subr.bf16.mxu0 0
  %2274 = vmatpush1.bf16.msra.mxu0 %v2239
  %2275 = vmatprep.subr.bf16.mxu0 0
  %2276 = vmatpush1.bf16.msra.mxu0 %v2240
  %2277 = vmatprep.subr.bf16.mxu0 0
  %2278 = vmatpush1.bf16.msra.mxu0 %v2241
  %2279 = vmatprep.subr.bf16.mxu0 0
  %2280 = vmatpush1.bf16.msra.mxu0 %v2242
  %2281 = vmatprep.subr.bf16.mxu0 0
  %2282 = vmatpush1.bf16.msra.mxu0 %v2243
  %2283 = vmatprep.subr.bf16.mxu0 0
  %2284 = vmatpush1.bf16.msra.mxu0 %v2244
  %2285 = vmatprep.subr.bf16.mxu0 0
  %2286 = vmatpush1.bf16.msra.mxu0 %v2245
  %2287 = vmatprep.subr.bf16.mxu0 0
  %2288 = vmatpush1.bf16.msra.mxu0 %v2246
  %2289 = vmatprep.subr.bf16.mxu0 0
  %2290 = vmatpush1.bf16.msra.mxu0 %v2247
  %2291 = vmatprep.subr.bf16.mxu0 0
  %2292 = vmatpush1.bf16.msra.mxu0 %v2248
  %2293 = vmatprep.subr.bf16.mxu0 0
  %2294 = vmatpush1.bf16.msra.mxu0 %v2249
  %2295 = vmatprep.subr.bf16.mxu0 0
  %2296 = vmatpush1.bf16.msra.mxu0 %v2250
  %2297 = vmatprep.subr.bf16.mxu0 0
  %2298 = vmatpush1.bf16.msra.mxu0 %v2251
  %2299 = vmatprep.subr.bf16.mxu0 0
  %2300 = vmatpush1.bf16.msra.mxu0 %v2252
  %2301 = vmatprep.mubr.bf16.mxu0 %v2133
  %2302 = vmatmul.mubr.bf16.gmra.mrb[0].mxu0 %v2132
  %v2303 = vpop.f32.mrb[0].mxu0
  %v2304 = vadd.f32 %v2171, %v2303
  %v2305 = vpop.f32.mrb[0].mxu0
  %v2306 = vpop.f32.mrb[0].mxu0
  %v2307 = vadd.f32 %v2171, %v2306
  %v2308 = vpop.f32.mrb[0].mxu0
  %2309 = vdwg.mxu0
  %v2310 = vmax.f32 %v2304, 0.0
  %v2311 = vmax.f32 %v2307, 0.0
  %v2312 = vpack.c.bf16 %v2311, %v2310
  %v2313 = vld [vmem:[%s7] sm:$0xf]
  %v2314 = vld [vmem:[%s7 + $0x4] sm:$0xf]
  %v2315 = vld [vmem:[%s7 + $0x8] sm:$0xf]
  %v2316 = vld [vmem:[%s7 + $0xc] sm:$0xf]
  %v2317 = vld [vmem:[%s7 + $0x10] sm:$0xf]
  %v2318 = vld [vmem:[%s7 + $0x14] sm:$0xf]
  %v2319 = vld [vmem:[%s7 + $0x18] sm:$0xf]
  %v2320 = vld [vmem:[%s7 + $0x1c] sm:$0xf]
  %v2321 = vld [vmem:[%s7 + $0x20] sm:$0xf]
  %v2322 = vld [vmem:[%s7 + $0x24] sm:$0xf]
  %v2323 = vld [vmem:[%s7 + $0x28] sm:$0xf]
  %v2324 = vld [vmem:[%s7 + $0x2c] sm:$0xf]
  %v2325 = vld [vmem:[%s7 + $0x30] sm:$0xf]
  %v2326 = vld [vmem:[%s7 + $0x34] sm:$0xf]
  %v2327 = vld [vmem:[%s7 + $0x38] sm:$0xf]
  %v2328 = vld [vmem:[%s7 + $0x3c] sm:$0xf]
  %v2329 = vld [vmem:[%s8] sm:$0x1]
  %v2331 = vlaneseq
  %v2332 = vshrl.u32 %v2331, 7
  %v2333 = vsub.s32 0, %v2332
  %v2334 = vrot.slane %v2329, %v2333
  %v2352 = vunpack.c.l.b16 %v2313
  %v2353 = vunpack.c.l.b16 %v2314
  %v2354 = vunpack.c.l.b16 %v2315
  %v2355 = vunpack.c.l.b16 %v2316
  %v2356 = vunpack.c.l.b16 %v2317
  %v2357 = vunpack.c.l.b16 %v2318
  %v2358 = vunpack.c.l.b16 %v2319
  %v2359 = vunpack.c.l.b16 %v2320
  %v2360 = vunpack.c.l.b16 %v2321
  %v2361 = vunpack.c.l.b16 %v2322
  %v2362 = vunpack.c.l.b16 %v2323
  %v2363 = vunpack.c.l.b16 %v2324
  %v2364 = vunpack.c.l.b16 %v2325
  %v2365 = vunpack.c.l.b16 %v2326
  %v2366 = vunpack.c.l.b16 %v2327
  %v2367 = vunpack.c.l.b16 %v2328
  %v2368 = vpack.c.b16 %v2353, %v2352
  %v2369 = vpack.c.b16 %v2355, %v2354
  %v2370 = vpack.c.b16 %v2357, %v2356
  %v2371 = vpack.c.b16 %v2359, %v2358
  %v2372 = vpack.c.b16 %v2361, %v2360
  %v2373 = vpack.c.b16 %v2363, %v2362
  %v2374 = vpack.c.b16 %v2365, %v2364
  %v2375 = vpack.c.b16 %v2367, %v2366
  %2384 = vmatprep.subr.bf16.mxu0 0
  %2385 = vmatpush1.bf16.msra.mxu0 %v2368
  %2386 = vmatprep.subr.bf16.mxu0 0
  %2387 = vmatpush1.bf16.msra.mxu0 %v2369
  %2388 = vmatprep.subr.bf16.mxu0 0
  %2389 = vmatpush1.bf16.msra.mxu0 %v2370
  %2390 = vmatprep.subr.bf16.mxu0 0
  %2391 = vmatpush1.bf16.msra.mxu0 %v2371
  %2392 = vmatprep.subr.bf16.mxu0 0
  %2393 = vmatpush1.bf16.msra.mxu0 %v2372
  %2394 = vmatprep.subr.bf16.mxu0 0
  %2395 = vmatpush1.bf16.msra.mxu0 %v2373
  %2396 = vmatprep.subr.bf16.mxu0 0
  %2397 = vmatpush1.bf16.msra.mxu0 %v2374
  %2398 = vmatprep.subr.bf16.mxu0 0
  %2399 = vmatpush1.bf16.msra.mxu0 %v2375
  %2400 = vmatprep.subr.bf16.mxu0 0
  %2401 = vmatpush1.bf16.msra.mxu0 0
  %2402 = vmatprep.subr.bf16.mxu0 0
  %2403 = vmatpush1.bf16.msra.mxu0 0
  %2404 = vmatprep.subr.bf16.mxu0 0
  %2405 = vmatpush1.bf16.msra.mxu0 0
  %2406 = vmatprep.subr.bf16.mxu0 0
  %2407 = vmatpush1.bf16.msra.mxu0 0
  %2408 = vmatprep.subr.bf16.mxu0 0
  %2409 = vmatpush1.bf16.msra.mxu0 0
  %2410 = vmatprep.subr.bf16.mxu0 0
  %2411 = vmatpush1.bf16.msra.mxu0 0
  %2412 = vmatprep.subr.bf16.mxu0 0
  %2413 = vmatpush1.bf16.msra.mxu0 0
  %2414 = vmatprep.subr.bf16.mxu0 0
  %2415 = vmatpush1.bf16.msra.mxu0 0
  %2416 = vmatprep.mubr.bf16.mxu0 0
  %2417 = vmatmul.mubr.bf16.gmra.mrb[0].mxu0 %v2312
  %v2418 = vpop.f32.mrb[0].mxu0
  %v2419 = vadd.f32 %v2334, %v2418
  %v2420 = vpop.f32.mrb[0].mxu0
  %v2421 = vpop.f32.mrb[0].mxu0
  %v2422 = vadd.f32 %v2334, %v2421
  %v2423 = vpop.f32.mrb[0].mxu0
  %2424 = vdwg.mxu0
  %v2425 = vmax.f32 %v2419, 0.0
  %v2426 = vmax.f32 %v2422, 0.0
  %v2427 = vpack.c.bf16 %v2426, %v2425
  %v2428 = vld [vmem:[%s9] sm:$0xf]
  %v2429 = vld [vmem:[%s9 + $0x4] sm:$0xf]
  %v2430 = vld [vmem:[%s9 + $0x8] sm:$0xf]
  %v2431 = vld [vmem:[%s9 + $0xc] sm:$0xf]
  %v2432 = vld [vmem:[%s9 + $0x10] sm:$0xf]
  %v2433 = vld [vmem:[%s9 + $0x14] sm:$0xf]
  %v2434 = vld [vmem:[%s9 + $0x18] sm:$0xf]
  %v2435 = vld [vmem:[%s9 + $0x1c] sm:$0xf]
  %v2436 = vld [vmem:[%s9 + $0x20] sm:$0xf]
  %v2437 = vld [vmem:[%s9 + $0x24] sm:$0xf]
  %v2438 = vld [vmem:[%s9 + $0x28] sm:$0xf]
  %v2439 = vld [vmem:[%s9 + $0x2c] sm:$0xf]
  %v2440 = vld [vmem:[%s9 + $0x30] sm:$0xf]
  %v2441 = vld [vmem:[%s9 + $0x34] sm:$0xf]
  %v2442 = vld [vmem:[%s9 + $0x38] sm:$0xf]
  %v2443 = vld [vmem:[%s9 + $0x3c] sm:$0xf]
  %v2444 = vld [vmem:[%s10] sm:$0x1]
  %v2446 = vlaneseq
  %v2447 = vshrl.u32 %v2446, 7
  %v2448 = vsub.s32 0, %v2447
  %v2449 = vrot.slane %v2444, %v2448
  %v2467 = vunpack.c.l.b16 %v2428
  %v2468 = vunpack.c.l.b16 %v2429
  %v2469 = vunpack.c.l.b16 %v2430
  %v2470 = vunpack.c.l.b16 %v2431
  %v2471 = vunpack.c.l.b16 %v2432
  %v2472 = vunpack.c.l.b16 %v2433
  %v2473 = vunpack.c.l.b16 %v2434
  %v2474 = vunpack.c.l.b16 %v2435
  %v2475 = vunpack.c.l.b16 %v2436
  %v2476 = vunpack.c.l.b16 %v2437
  %v2477 = vunpack.c.l.b16 %v2438
  %v2478 = vunpack.c.l.b16 %v2439
  %v2479 = vunpack.c.l.b16 %v2440
  %v2480 = vunpack.c.l.b16 %v2441
  %v2481 = vunpack.c.l.b16 %v2442
  %v2482 = vunpack.c.l.b16 %v2443
  %v2483 = vpack.c.b16 %v2468, %v2467
  %v2484 = vpack.c.b16 %v2470, %v2469
  %v2485 = vpack.c.b16 %v2472, %v2471
  %v2486 = vpack.c.b16 %v2474, %v2473
  %v2487 = vpack.c.b16 %v2476, %v2475
  %v2488 = vpack.c.b16 %v2478, %v2477
  %v2489 = vpack.c.b16 %v2480, %v2479
  %v2490 = vpack.c.b16 %v2482, %v2481
  %2499 = vmatprep.subr.bf16.mxu0 0
  %2500 = vmatpush1.bf16.msra.mxu0 %v2483
  %2501 = vmatprep.subr.bf16.mxu0 0
  %2502 = vmatpush1.bf16.msra.mxu0 %v2484
  %2503 = vmatprep.subr.bf16.mxu0 0
  %2504 = vmatpush1.bf16.msra.mxu0 %v2485
  %2505 = vmatprep.subr.bf16.mxu0 0
  %2506 = vmatpush1.bf16.msra.mxu0 %v2486
  %2507 = vmatprep.subr.bf16.mxu0 0
  %2508 = vmatpush1.bf16.msra.mxu0 %v2487
  %2509 = vmatprep.subr.bf16.mxu0 0
  %2510 = vmatpush1.bf16.msra.mxu0 %v2488
  %2511 = vmatprep.subr.bf16.mxu0 0
  %2512 = vmatpush1.bf16.msra.mxu0 %v2489
  %2513 = vmatprep.subr.bf16.mxu0 0
  %2514 = vmatpush1.bf16.msra.mxu0 %v2490
  %2515 = vmatprep.subr.bf16.mxu0 0
  %2516 = vmatpush1.bf16.msra.mxu0 0
  %2517 = vmatprep.subr.bf16.mxu0 0
  %2518 = vmatpush1.bf16.msra.mxu0 0
  %2519 = vmatprep.subr.bf16.mxu0 0
  %2520 = vmatpush1.bf16.msra.mxu0 0
  %2521 = vmatprep.subr.bf16.mxu0 0
  %2522 = vmatpush1.bf16.msra.mxu0 0
  %2523 = vmatprep.subr.bf16.mxu0 0
  %2524 = vmatpush1.bf16.msra.mxu0 0
  %2525 = vmatprep.subr.bf16.mxu0 0
  %2526 = vmatpush1.bf16.msra.mxu0 0
  %2527 = vmatprep.subr.bf16.mxu0 0
  %2528 = vmatpush1.bf16.msra.mxu0 0
  %2529 = vmatprep.subr.bf16.mxu0 0
  %2530 = vmatpush1.bf16.msra.mxu0 0
  %2531 = vmatprep.mubr.bf16.mxu0 0
  %2532 = vmatmul.mubr.bf16.gmra.mrb[0].mxu0 %v2427
  %v2533 = vpop.f32.mrb[0].mxu0
  %v2534 = vadd.f32 %v2449, %v2533
  %v2535 = vpop.f32.mrb[0].mxu0
  %v2536 = vpop.f32.mrb[0].mxu0
  %v2537 = vadd.f32 %v2449, %v2536
  %v2538 = vpop.f32.mrb[0].mxu0
  %2539 = vdwg.mxu0
  %v2540 = vmax.f32 %v2534, 0.0
  %v2541 = vmax.f32 %v2537, 0.0
  %v2542 = vpack.c.bf16 %v2541, %v2540
  %v2543 = vld [vmem:[%s11] sm:$0xf]
  %v2544 = vld [vmem:[%s11 + $0x4] sm:$0xf]
  %v2545 = vld [vmem:[%s11 + $0x8] sm:$0xf]
  %v2546 = vld [vmem:[%s11 + $0xc] sm:$0xf]
  %v2547 = vld [vmem:[%s11 + $0x10] sm:$0xf]
  %v2548 = vld [vmem:[%s11 + $0x14] sm:$0xf]
  %v2549 = vld [vmem:[%s11 + $0x18] sm:$0xf]
  %v2550 = vld [vmem:[%s11 + $0x1c] sm:$0xf]
  %v2551 = vld [vmem:[%s11 + $0x20] sm:$0xf]
  %v2552 = vld [vmem:[%s11 + $0x24] sm:$0xf]
  %v2553 = vld [vmem:[%s11 + $0x28] sm:$0xf]
  %v2554 = vld [vmem:[%s11 + $0x2c] sm:$0xf]
  %v2555 = vld [vmem:[%s11 + $0x30] sm:$0xf]
  %v2556 = vld [vmem:[%s11 + $0x34] sm:$0xf]
  %v2557 = vld [vmem:[%s11 + $0x38] sm:$0xf]
  %v2558 = vld [vmem:[%s11 + $0x3c] sm:$0xf]
  %v2559 = vld [vmem:[%s12] sm:$0x1]
  %v2561 = vlaneseq
  %v2562 = vshrl.u32 %v2561, 7
  %v2563 = vsub.s32 0, %v2562
  %v2564 = vrot.slane %v2559, %v2563
  %v2582 = vunpack.c.l.b16 %v2543
  %v2583 = vunpack.c.l.b16 %v2544
  %v2584 = vunpack.c.l.b16 %v2545
  %v2585 = vunpack.c.l.b16 %v2546
  %v2586 = vunpack.c.l.b16 %v2547
  %v2587 = vunpack.c.l.b16 %v2548
  %v2588 = vunpack.c.l.b16 %v2549
  %v2589 = vunpack.c.l.b16 %v2550
  %v2590 = vunpack.c.l.b16 %v2551
  %v2591 = vunpack.c.l.b16 %v2552
  %v2592 = vunpack.c.l.b16 %v2553
  %v2593 = vunpack.c.l.b16 %v2554
  %v2594 = vunpack.c.l.b16 %v2555
  %v2595 = vunpack.c.l.b16 %v2556
  %v2596 = vunpack.c.l.b16 %v2557
  %v2597 = vunpack.c.l.b16 %v2558
  %v2598 = vpack.c.b16 %v2583, %v2582
  %v2599 = vpack.c.b16 %v2585, %v2584
  %v2600 = vpack.c.b16 %v2587, %v2586
  %v2601 = vpack.c.b16 %v2589, %v2588
  %v2602 = vpack.c.b16 %v2591, %v2590
  %v2603 = vpack.c.b16 %v2593, %v2592
  %v2604 = vpack.c.b16 %v2595, %v2594
  %v2605 = vpack.c.b16 %v2597, %v2596
  %2614 = vmatprep.subr.bf16.mxu0 0
  %2615 = vmatpush1.bf16.msra.mxu0 %v2598
  %2616 = vmatprep.subr.bf16.mxu0 0
  %2617 = vmatpush1.bf16.msra.mxu0 %v2599
  %2618 = vmatprep.subr.bf16.mxu0 0
  %2619 = vmatpush1.bf16.msra.mxu0 %v2600
  %2620 = vmatprep.subr.bf16.mxu0 0
  %2621 = vmatpush1.bf16.msra.mxu0 %v2601
  %2622 = vmatprep.subr.bf16.mxu0 0
  %2623 = vmatpush1.bf16.msra.mxu0 %v2602
  %2624 = vmatprep.subr.bf16.mxu0 0
  %2625 = vmatpush1.bf16.msra.mxu0 %v2603
  %2626 = vmatprep.subr.bf16.mxu0 0
  %2627 = vmatpush1.bf16.msra.mxu0 %v2604
  %2628 = vmatprep.subr.bf16.mxu0 0
  %2629 = vmatpush1.bf16.msra.mxu0 %v2605
  %2630 = vmatprep.subr.bf16.mxu0 0
  %2631 = vmatpush1.bf16.msra.mxu0 0
  %2632 = vmatprep.subr.bf16.mxu0 0
  %2633 = vmatpush1.bf16.msra.mxu0 0
  %2634 = vmatprep.subr.bf16.mxu0 0
  %2635 = vmatpush1.bf16.msra.mxu0 0
  %2636 = vmatprep.subr.bf16.mxu0 0
  %2637 = vmatpush1.bf16.msra.mxu0 0
  %2638 = vmatprep.subr.bf16.mxu0 0
  %2639 = vmatpush1.bf16.msra.mxu0 0
  %2640 = vmatprep.subr.bf16.mxu0 0
  %2641 = vmatpush1.bf16.msra.mxu0 0
  %2642 = vmatprep.subr.bf16.mxu0 0
  %2643 = vmatpush1.bf16.msra.mxu0 0
  %2644 = vmatprep.subr.bf16.mxu0 0
  %2645 = vmatpush1.bf16.msra.mxu0 0
  %2646 = vmatprep.mubr.bf16.mxu0 0
  %2647 = vmatmul.mubr.bf16.gmra.mrb[0].mxu0 %v2542
  %v2648 = vpop.f32.mrb[0].mxu0
  %v2649 = vadd.f32 %v2564, %v2648
  %v2650 = vpop.f32.mrb[0].mxu0
  %v2651 = vpop.f32.mrb[0].mxu0
  %v2652 = vadd.f32 %v2564, %v2651
  %v2653 = vpop.f32.mrb[0].mxu0
  %2654 = vdwg.mxu0
  %2655 = vmax.xlane.f32.xlu0 %v2649
  %v2656 = vpop.xlane.xlu0 %2655
  %2657 = vmax.xlane.f32.xlu0 %v2652
  %v2658 = vpop.xlane.xlu0 %2657
  %v2659 = vsub.f32 %v2649, %v2656
  %v2660 = vsub.f32 %v2652, %v2658
  %v2661 = vmul.f32 %v2659, 1.442695
  %v2662 = vpow.pop %v2661
  %v2663 = vmul.f32 %v2660, 1.442695
  %v2664 = vpow.pop %v2663
  %2665 = vadd.xlane.f32.xlu0 %v2662
  %v2666 = vpop.xlane.xlu0 %2665
  %2667 = vadd.xlane.f32.xlu0 %v2664
  %v2668 = vpop.xlane.xlu0 %2667
  %v2669 = vlog2.pop %v2666
  %v2670 = vmul.f32 %v2669, 0.6931472
  %v2671 = vlog2.pop %v2668
  %v2672 = vmul.f32 %v2671, 0.6931472
  %v2673 = vsub.f32 %v2659, %v2670
  %v2674 = vsub.f32 %v2660, %v2672
  %2675 = vst [vmem:[%s13] sm:$0xff] %v2673
  %2676 = vst [vmem:[%s13 + $0x8] sm:$0xff] %v2674
  // Predicated region
  $region54: #{mlp_forward.1} parent=0 // pred_check
    _
  $region55: #{mlp_forward.1} parent=0 // pred_check_branch
    %2678 = sbr.rel (0) target = $region57
  $region56: #{mlp_forward.1} parent=0 // pred_region
    _
  $region57: #{mlp_forward.1} parent=0 // pred_fallthru
    _
  // Predicated region
  $region58: #{mlp_forward.1} parent=0 // pred_check
    _
  $region59: #{mlp_forward.1} parent=0 // pred_check_branch
    %2680 = sbr.rel (0) target = $region61
  $region60: #{mlp_forward.1} parent=0 // pred_region
    _
  $region61: #{mlp_forward.1} parent=0 // pred_fallthru
    _

</llo_original>
